<compile_context>
chip_gen: v7x
topology: tpu7x:2x2x1
jax: 0.10.0
libtpu: 0.0.40
codegen_flags: <defaults>
</compile_context>

<pallas_src>
import numpy as np
import jax
import jax.numpy as jnp
from jax.experimental import pallas as pl
from jax.experimental.pallas import tpu as pltpu

N_JOINTS = 25
N_AUG = 2 * N_JOINTS          # raw joints + per-row (next - current) joints
N_IDX = 389                   # 381 dot-product rows + 8 angle rows
N_OUT = N_IDX + 3             # + 3 pelvis-velocity columns -> 392
W_PAD = 512                   # lane-dense padded output width (multiple of 128)
HALO = 8                      # leading halo rows per tile (sublane aligned)


def _round_up(x, m):
    return ((x + m - 1) // m) * m


def _acos_f32(x):
    """fdlibm-style float32 arccos built only from mul/add/div/sqrt/where."""
    pio2 = 1.5707963267948966
    pi = 3.141592653589793
    pS0 = 1.6666586697e-01
    pS1 = -4.2743422091e-02
    pS2 = -8.6563630030e-03
    qS1 = -7.0662963390e-01

    def r(z):
        p = z * (pS0 + z * (pS1 + z * pS2))
        q = 1.0 + z * qS1
        return p / q

    ax = jnp.abs(x)
    z_small = x * x
    acos_small = pio2 - (x + x * r(z_small))
    z_pos = (1.0 - x) * 0.5
    s_pos = jnp.sqrt(z_pos)
    acos_pos = 2.0 * (s_pos + s_pos * r(z_pos))
    z_neg = (1.0 + x) * 0.5
    s_neg = jnp.sqrt(z_neg)
    acos_neg = pi - 2.0 * (s_neg + s_neg * r(z_neg))
    return jnp.where(ax <= 0.5, acos_small, jnp.where(x > 0.5, acos_pos, acos_neg))


def _make_kernel(total_t):
    def kernel(joi_ref, a_aug_ref, b_ref, ax_sel_ref, ang_a_ref, ang_b_ref,
               ang_place_ref, out_ref):
        # joi_ref: (1, 3, H, 50)   H = TQ + HALO   (leading HALO rows = halo)
        # out_ref: (TQ, W_PAD)
        f32 = jnp.float32
        h = joi_ref.shape[2]
        tq = out_ref.shape[0]
        w = out_ref.shape[1]

        jx = joi_ref[0, 0]            # (H, 50): cols 0..24 coords, 25..49 next-diff
        jy = joi_ref[0, 1]
        jz = joi_ref[0, 2]

        # ---- axis construction via constant selector matmuls, narrow (H, 8) ----
        c_sel = ax_sel_ref[0]         # limb differences (same coordinate)
        d_sel = ax_sel_ref[1]         # cross column for ax_x (uses y coords)
        e_sel = ax_sel_ref[2]         # cross column for ax_y (uses x coords)

        lane8 = jax.lax.broadcasted_iota(jnp.int32, (1, 8), 1)
        ones_a3 = (lane8 == 3).astype(f32)              # axis 3 = (1, 1, 1)
        ones_z = ones_a3 + (lane8 == 0).astype(f32)     # axis 0 = (0, 0, 1)

        ax_x = (jnp.dot(jx, c_sel, preferred_element_type=f32)
                + jnp.dot(jy, d_sel, preferred_element_type=f32) + ones_a3)
        ax_y = (jnp.dot(jy, c_sel, preferred_element_type=f32)
                + jnp.dot(jx, e_sel, preferred_element_type=f32) + ones_a3)
        ax_z = jnp.dot(jz, c_sel, preferred_element_type=f32) + ones_z

        inv_norm = jax.lax.rsqrt(ax_x * ax_x + ax_y * ax_y + ax_z * ax_z)
        ax_x = ax_x * inv_norm
        ax_y = ax_y * inv_norm
        ax_z = ax_z * inv_norm

        a_aug = a_aug_ref[...]        # (50, W)  signed joint selector + pelvis-vel rows
        b_mat = b_ref[...]            # (8, W)   axis one-hot selector
        ang_a = ang_a_ref[...]        # (50, 8)  signed joint selector for angle rows
        ang_b = ang_b_ref[...]        # (8, 8)   axis one-hot for angle rows
        ang_place = ang_place_ref[...]  # (8, W)  scatter angle values to lanes 381..388

        dot = jnp.zeros((h, w), f32)
        dot_ang = jnp.zeros((h, 8), f32)
        nsq_ang = jnp.zeros((h, 8), f32)
        for jc, axc in ((jx, ax_x), (jy, ax_y), (jz, ax_z)):
            diff_c = jnp.dot(jc, a_aug, preferred_element_type=f32)    # (H, W)
            axsel_c = jnp.dot(axc, b_mat, preferred_element_type=f32)  # (H, W)
            dot = dot + diff_c * axsel_c
            dif_a = jnp.dot(jc, ang_a, preferred_element_type=f32)     # (H, 8)
            ax_a = jnp.dot(axc, ang_b, preferred_element_type=f32)     # (H, 8)
            dot_ang = dot_ang + dif_a * ax_a
            nsq_ang = nsq_ang + dif_a * dif_a

        # ---- narrow (H, 8) angle path: norm, cos, arccos ----
        cos = dot_ang / (jnp.sqrt(nsq_ang) + 1e-8)
        cos = jnp.clip(cos, -1.0, 1.0)   # guard acos domain (ref yields NaN there)
        ang = _acos_f32(cos)
        ang_wide = jnp.dot(ang, ang_place, preferred_element_type=f32)  # (H, W)

        lane = jax.lax.broadcasted_iota(jnp.int32, (1, w), 1)
        angle_mask = (lane >= 381) & (lane < 389)
        pel_mask = (lane >= 389) & (lane < 392)
        diff_mask = (lane < 115) | angle_mask

        indicators = jnp.where(angle_mask, ang_wide, dot)

        # ---- temporal structure via sublane rolls (no (T,T) shift matmuls) ----
        r_idx = jax.lax.broadcasted_iota(jnp.int32, (h, 1), 0)
        grow = pl.program_id(0) * tq - HALO + r_idx      # global frame index per row
        is_row0 = grow == 0
        is_last = grow == (total_t - 1)

        ind_prev = pltpu.roll(indicators, shift=1, axis=0)      # row r -> row r-1 value
        ind_next = pltpu.roll(indicators, shift=h - 1, axis=0)  # row r -> row r+1 value

        # pelvis-velocity columns: global last row duplicates previous row's value
        ind_fixed = jnp.where(pel_mask & is_last, ind_prev, indicators)
        # temporal diff: global row 0 uses forward diff, all other rows backward diff
        d = jnp.where(is_row0, ind_next - indicators, indicators - ind_prev)
        final = jnp.where(diff_mask, d, ind_fixed)

        # deadband + sign
        # TODO(synk): NaN inputs map to 0 here instead of NaN (torch.sign(NaN)=NaN);
        # only reachable for degenerate zero-length limb axes.
        final = jnp.where(jnp.abs(final) < 1e-3, 0.0, final)
        out = jnp.where(final > 0.0, 1.0, jnp.where(final < 0.0, -1.0, 0.0))
        out_ref[...] = out[HALO:, :].astype(out_ref.dtype)

    return kernel


def make_constants(idx):
    """Constant selection matrices (all zero-padded to W_PAD lanes)."""
    cols = np.arange(N_IDX)

    # Signed joint-difference selector over the augmented (50-row) joint block.
    a = np.zeros((N_AUG, W_PAD), np.float32)
    a[idx[:, 0], cols] += 1.0
    a[idx[:, 1], cols] -= 1.0
    # Pelvis-velocity columns read the precomputed (next - current) pelvis row.
    a[N_JOINTS + 0, N_IDX:N_OUT] = 1.0

    # Axis one-hot selector.
    b = np.zeros((8, W_PAD), np.float32)
    b[idx[:, 2], cols] = 1.0
    b[np.arange(3), N_IDX + np.arange(3)] = 1.0   # pelvis-vel cols use axes 0,1,2

    # Axis-construction selectors (columns = 8 axes).
    c = np.zeros((N_AUG, 8), np.float32)
    c[2, 1] += 1.0; c[1, 1] -= 1.0      # axis1 = right_hip - left_hip
    c[16, 4] += 1.0; c[18, 4] -= 1.0    # axis4 = l_shoulder - l_elbow
    c[1, 5] += 1.0; c[4, 5] -= 1.0      # axis5 = l_hip - l_knee
    c[17, 6] += 1.0; c[19, 6] -= 1.0    # axis6 = r_shoulder - r_elbow
    c[2, 7] += 1.0; c[5, 7] -= 1.0      # axis7 = r_hip - r_knee
    d = np.zeros((N_AUG, 8), np.float32)   # ax_x cross col: -a1y = jy[1] - jy[2]
    d[1, 2] += 1.0; d[2, 2] -= 1.0
    e = np.zeros((N_AUG, 8), np.float32)   # ax_y cross col: +a1x = jx[2] - jx[1]
    e[2, 2] += 1.0; e[1, 2] -= 1.0
    ax_sel = np.stack([c, d, e], axis=0)   # (3, 50, 8)

    # Narrow angle path selectors.
    ang_rows = np.arange(381, 389)
    ang_a = np.zeros((N_AUG, 8), np.float32)
    ang_a[idx[ang_rows, 0], np.arange(8)] += 1.0
    ang_a[idx[ang_rows, 1], np.arange(8)] -= 1.0
    ang_b = np.zeros((8, 8), np.float32)
    ang_b[idx[ang_rows, 2], np.arange(8)] = 1.0
    ang_place = np.zeros((8, W_PAD), np.float32)
    ang_place[np.arange(8), 381 + np.arange(8)] = 1.0

    return tuple(jnp.asarray(x) for x in (a, b, ax_sel, ang_a, ang_b, ang_place))


def joi2kp_forward(joi, consts, *, tile_rows=256):
    a_aug, b_mat, ax_sel, ang_a, ang_b, ang_place = consts
    t = joi.shape[0]
    f32 = jnp.float32

    tq = min(_round_up(tile_rows, 8), _round_up(max(t, 2), 8))
    nt = -(-t // tq)
    t_pad = nt * tq
    h = tq + HALO

    # Per-row augmented joint block: [joints | next_frame - joints] (pelvis row of
    # the second half carries the pelvis velocity used by columns 389..391).
    joi32 = joi.astype(f32)                                        # (T, 25, 3)
    joi_next = jnp.concatenate([joi32[1:], joi32[-1:]], axis=0)
    joi_cat = jnp.concatenate([joi32, joi_next - joi32], axis=1)   # (T, 50, 3)

    # Overlapping slabs with an 8-row leading halo (clamped at the ends).
    row_ids = np.clip(
        np.arange(nt)[:, None] * tq + np.arange(-HALO, tq)[None, :], 0, t - 1)
    slab = jnp.transpose(joi_cat[row_ids], (0, 3, 1, 2))           # (nt, 3, H, 50)

    out = pl.pallas_call(
        _make_kernel(t),
        out_shape=jax.ShapeDtypeStruct((t_pad, W_PAD), f32),
        grid=(nt,),
        in_specs=[
            pl.BlockSpec((1, 3, h, N_AUG), lambda i: (i, 0, 0, 0)),
            pl.BlockSpec(a_aug.shape, lambda i: (0, 0)),
            pl.BlockSpec(b_mat.shape, lambda i: (0, 0)),
            pl.BlockSpec(ax_sel.shape, lambda i: (0, 0, 0)),
            pl.BlockSpec(ang_a.shape, lambda i: (0, 0)),
            pl.BlockSpec(ang_b.shape, lambda i: (0, 0)),
            pl.BlockSpec(ang_place.shape, lambda i: (0, 0)),
        ],
        out_specs=pl.BlockSpec((tq, W_PAD), lambda i: (i, 0)),
        compiler_params=pltpu.CompilerParams(
            dimension_semantics=("parallel",),
            vmem_limit_bytes=32 * 1024 * 1024,
        ),
    )(slab, a_aug, b_mat, ax_sel, ang_a, ang_b, ang_place)
    return out[:t, :N_OUT]


def reference(joi, idx):
    """Pure-JAX mirror of the PyTorch forward (index=None path)."""
    axis = jnp.zeros((joi.shape[0], 8, 3), jnp.float32)
    axis = axis.at[:, 0, 2].set(1.0)
    axis = axis.at[:, 1].set(joi[:, 2] - joi[:, 1])
    axis = axis.at[:, 2].set(jnp.cross(axis[:, 0], axis[:, 1]))
    axis = axis.at[:, 3].set(1.0)
    axis = axis.at[:, 4].set(joi[:, 16] - joi[:, 18])
    axis = axis.at[:, 5].set(joi[:, 1] - joi[:, 4])
    axis = axis.at[:, 6].set(joi[:, 17] - joi[:, 19])
    axis = axis.at[:, 7].set(joi[:, 2] - joi[:, 5])
    axis = axis / jnp.linalg.norm(axis, axis=2, keepdims=True)

    ind1 = jnp.sum((joi[:, idx[:381, 0]] - joi[:, idx[:381, 1]]) * axis[:, idx[:381, 2]], axis=-1)
    d2 = joi[:, idx[381:, 0]] - joi[:, idx[381:, 1]]
    ind2 = jnp.arccos(jnp.sum(d2 * axis[:, idx[381:, 2]]
                              / (jnp.linalg.norm(d2, axis=2, keepdims=True) + 1e-8), axis=-1))
    ind3 = jnp.sum((joi[1:, [0, 0, 0]] - joi[:-1, [0, 0, 0]]) * axis[:-1, :3], axis=-1)
    ind3 = jnp.concatenate([ind3, ind3[-1:]], axis=0)
    indicators = jnp.concatenate([ind1, ind2, ind3], axis=1)

    d = jnp.diff(indicators[:, :115], axis=0)
    indicators = indicators.at[1:, :115].set(d)
    indicators = indicators.at[:1, :115].set(indicators[1:2, :115])
    d = jnp.diff(indicators[:, 381:389], axis=0)
    indicators = indicators.at[1:, 381:389].set(d)
    indicators = indicators.at[:1, 381:389].set(indicators[1:2, 381:389])
    indicators = jnp.where(jnp.abs(indicators) < 1e-3, 0.0, indicators)
    return jnp.sign(indicators)


if __name__ == "__main__":
    # TODO(synk): meta_info.pkl is unavailable; synthesize a deterministic idx table
    # with the same structure (389 rows of [joint_a, joint_b, axis]; angle rows use
    # limb axes 4..7) instead of loading it from disk.
    rng = np.random.default_rng(0)
    idx = np.stack(
        [
            rng.integers(0, N_JOINTS, size=N_IDX),
            rng.integers(0, N_JOINTS, size=N_IDX),
            rng.integers(0, 8, size=N_IDX),
        ],
        axis=1,
    ).astype(np.int32)
    idx[381:, 2] = rng.integers(4, 8, size=8)
    idx[381:, 1] = (idx[381:, 0] + 1) % N_JOINTS  # avoid degenerate zero-length vectors

    consts = make_constants(idx)

    # deterministic example input: T=8 frames, 25 SMPLX joints, xyz
    key = jax.random.PRNGKey(0)
    joi = jax.random.normal(key, (8, N_JOINTS, 3), dtype=jnp.float32)

    out = joi2kp_forward(joi, consts)
    out = jax.block_until_ready(out)

    ref = np.asarray(reference(joi, idx))
    out_np = np.asarray(out)
    assert out_np.shape == (8, N_OUT)
    match = np.mean(out_np == ref)
    assert match >= 0.99, f"kernel/reference mismatch fraction {1.0 - match}"

    print("KERNEL_OK")
</pallas_src>

<mosaic_0001>
module attributes {stable_mosaic.version = 11 : i64} {
  func.func @kernel(%arg0: i32, %arg1: memref<1x3x16x50xf32, #tpu.memory_space<vmem>>, %arg2: memref<50x512xf32, #tpu.memory_space<vmem>>, %arg3: memref<8x512xf32, #tpu.memory_space<vmem>>, %arg4: memref<3x50x8xf32, #tpu.memory_space<vmem>>, %arg5: memref<50x8xf32, #tpu.memory_space<vmem>>, %arg6: memref<8x8xf32, #tpu.memory_space<vmem>>, %arg7: memref<8x512xf32, #tpu.memory_space<vmem>>, %arg8: memref<8x512xf32, #tpu.memory_space<vmem>>) attributes {dimension_semantics = [#tpu.dimension_semantics<parallel>], iteration_bounds = array<i64: 1>, scalar_prefetch = 0 : i64, scratch_operands = 0 : i64, tpu.core_type = #tpu.core_type<tc>, window_params = [{transform_indices = @transform_0, window_bounds = array<i64: 1, 3, 16, 50>}, {pipeline_mode = #tpu.pipeline_mode<synchronous>, transform_indices = @transform_1, window_bounds = array<i64: 50, 512>}, {pipeline_mode = #tpu.pipeline_mode<synchronous>, transform_indices = @transform_2, window_bounds = array<i64: 8, 512>}, {pipeline_mode = #tpu.pipeline_mode<synchronous>, transform_indices = @transform_3, window_bounds = array<i64: 3, 50, 8>}, {pipeline_mode = #tpu.pipeline_mode<synchronous>, transform_indices = @transform_4, window_bounds = array<i64: 50, 8>}, {pipeline_mode = #tpu.pipeline_mode<synchronous>, transform_indices = @transform_5, window_bounds = array<i64: 8, 8>}, {pipeline_mode = #tpu.pipeline_mode<synchronous>, transform_indices = @transform_6, window_bounds = array<i64: 8, 512>}, {transform_indices = @transform_7, window_bounds = array<i64: 8, 512>}]} {
    %c0 = arith.constant 0 : index
    %c0_0 = arith.constant 0 : index
    %c0_1 = arith.constant 0 : index
    %c0_2 = arith.constant 0 : index
    %0 = vector.load %arg1[%c0, %c0_0, %c0_1, %c0_2] : memref<1x3x16x50xf32, #tpu.memory_space<vmem>>, vector<1x1x16x50xf32>
    %1 = vector.shape_cast %0 : vector<1x1x16x50xf32> to vector<16x50xf32>
    %c0_3 = arith.constant 0 : index
    %c1 = arith.constant 1 : index
    %c0_4 = arith.constant 0 : index
    %c0_5 = arith.constant 0 : index
    %2 = vector.load %arg1[%c0_3, %c1, %c0_4, %c0_5] : memref<1x3x16x50xf32, #tpu.memory_space<vmem>>, vector<1x1x16x50xf32>
    %3 = vector.shape_cast %2 : vector<1x1x16x50xf32> to vector<16x50xf32>
    %c0_6 = arith.constant 0 : index
    %c2 = arith.constant 2 : index
    %c0_7 = arith.constant 0 : index
    %c0_8 = arith.constant 0 : index
    %4 = vector.load %arg1[%c0_6, %c2, %c0_7, %c0_8] : memref<1x3x16x50xf32, #tpu.memory_space<vmem>>, vector<1x1x16x50xf32>
    %5 = vector.shape_cast %4 : vector<1x1x16x50xf32> to vector<16x50xf32>
    %c0_9 = arith.constant 0 : index
    %c0_10 = arith.constant 0 : index
    %c0_11 = arith.constant 0 : index
    %6 = vector.load %arg4[%c0_9, %c0_10, %c0_11] : memref<3x50x8xf32, #tpu.memory_space<vmem>>, vector<1x50x8xf32>
    %7 = vector.shape_cast %6 : vector<1x50x8xf32> to vector<50x8xf32>
    %c1_12 = arith.constant 1 : index
    %c0_13 = arith.constant 0 : index
    %c0_14 = arith.constant 0 : index
    %8 = vector.load %arg4[%c1_12, %c0_13, %c0_14] : memref<3x50x8xf32, #tpu.memory_space<vmem>>, vector<1x50x8xf32>
    %9 = vector.shape_cast %8 : vector<1x50x8xf32> to vector<50x8xf32>
    %c2_15 = arith.constant 2 : index
    %c0_16 = arith.constant 0 : index
    %c0_17 = arith.constant 0 : index
    %10 = vector.load %arg4[%c2_15, %c0_16, %c0_17] : memref<3x50x8xf32, #tpu.memory_space<vmem>>, vector<1x50x8xf32>
    %11 = vector.shape_cast %10 : vector<1x50x8xf32> to vector<50x8xf32>
    %12 = tpu.iota {dimensions = array<i32: 1>} : vector<1x8xi32>
    %c3_i32 = arith.constant 3 : i32
    %13 = vector.broadcast %c3_i32 : i32 to vector<1x8xi32>
    %14 = arith.cmpi eq, %12, %13 : vector<1x8xi32>
    %15 = arith.extui %14 : vector<1x8xi1> to vector<1x8xi32>
    %16 = arith.sitofp %15 : vector<1x8xi32> to vector<1x8xf32>
    %c0_i32 = arith.constant 0 : i32
    %17 = vector.broadcast %c0_i32 : i32 to vector<1x8xi32>
    %18 = arith.cmpi eq, %12, %17 : vector<1x8xi32>
    %19 = arith.extui %18 : vector<1x8xi1> to vector<1x8xi32>
    %20 = arith.sitofp %19 : vector<1x8xi32> to vector<1x8xf32>
    %21 = arith.addf %16, %20 : vector<1x8xf32>
    %cst = arith.constant dense<0.000000e+00> : vector<16x8xf32>
    %22 = tpu.matmul %1, %7, %cst {dimension_numbers = #tpu.dot_dimension_numbers<[1], [0], [0], [1], [0, 0, 1, 1], [], []>} : vector<16x50xf32>, vector<50x8xf32>, vector<16x8xf32> -> vector<16x8xf32>
    %cst_18 = arith.constant dense<0.000000e+00> : vector<16x8xf32>
    %23 = tpu.matmul %3, %9, %cst_18 {dimension_numbers = #tpu.dot_dimension_numbers<[1], [0], [0], [1], [0, 0, 1, 1], [], []>} : vector<16x50xf32>, vector<50x8xf32>, vector<16x8xf32> -> vector<16x8xf32>
    %24 = arith.addf %22, %23 : vector<16x8xf32>
    %25 = vector.broadcast %16 : vector<1x8xf32> to vector<16x8xf32>
    %26 = arith.addf %24, %25 : vector<16x8xf32>
    %cst_19 = arith.constant dense<0.000000e+00> : vector<16x8xf32>
    %27 = tpu.matmul %3, %7, %cst_19 {dimension_numbers = #tpu.dot_dimension_numbers<[1], [0], [0], [1], [0, 0, 1, 1], [], []>} : vector<16x50xf32>, vector<50x8xf32>, vector<16x8xf32> -> vector<16x8xf32>
    %cst_20 = arith.constant dense<0.000000e+00> : vector<16x8xf32>
    %28 = tpu.matmul %1, %11, %cst_20 {dimension_numbers = #tpu.dot_dimension_numbers<[1], [0], [0], [1], [0, 0, 1, 1], [], []>} : vector<16x50xf32>, vector<50x8xf32>, vector<16x8xf32> -> vector<16x8xf32>
    %29 = arith.addf %27, %28 : vector<16x8xf32>
    %30 = vector.broadcast %16 : vector<1x8xf32> to vector<16x8xf32>
    %31 = arith.addf %29, %30 : vector<16x8xf32>
    %cst_21 = arith.constant dense<0.000000e+00> : vector<16x8xf32>
    %32 = tpu.matmul %5, %7, %cst_21 {dimension_numbers = #tpu.dot_dimension_numbers<[1], [0], [0], [1], [0, 0, 1, 1], [], []>} : vector<16x50xf32>, vector<50x8xf32>, vector<16x8xf32> -> vector<16x8xf32>
    %33 = vector.broadcast %21 : vector<1x8xf32> to vector<16x8xf32>
    %34 = arith.addf %32, %33 : vector<16x8xf32>
    %35 = arith.mulf %26, %26 : vector<16x8xf32>
    %36 = arith.mulf %31, %31 : vector<16x8xf32>
    %37 = arith.addf %35, %36 : vector<16x8xf32>
    %38 = arith.mulf %34, %34 : vector<16x8xf32>
    %39 = arith.addf %37, %38 : vector<16x8xf32>
    %40 = math.rsqrt %39 : vector<16x8xf32>
    %41 = arith.mulf %26, %40 : vector<16x8xf32>
    %42 = arith.mulf %31, %40 : vector<16x8xf32>
    %43 = arith.mulf %34, %40 : vector<16x8xf32>
    %c0_22 = arith.constant 0 : index
    %c0_23 = arith.constant 0 : index
    %44 = vector.load %arg2[%c0_22, %c0_23] : memref<50x512xf32, #tpu.memory_space<vmem>>, vector<50x512xf32>
    %c0_24 = arith.constant 0 : index
    %c0_25 = arith.constant 0 : index
    %45 = vector.load %arg3[%c0_24, %c0_25] : memref<8x512xf32, #tpu.memory_space<vmem>>, vector<8x512xf32>
    %c0_26 = arith.constant 0 : index
    %c0_27 = arith.constant 0 : index
    %46 = vector.load %arg5[%c0_26, %c0_27] : memref<50x8xf32, #tpu.memory_space<vmem>>, vector<50x8xf32>
    %c0_28 = arith.constant 0 : index
    %c0_29 = arith.constant 0 : index
    %47 = vector.load %arg6[%c0_28, %c0_29] : memref<8x8xf32, #tpu.memory_space<vmem>>, vector<8x8xf32>
    %c0_30 = arith.constant 0 : index
    %c0_31 = arith.constant 0 : index
    %48 = vector.load %arg7[%c0_30, %c0_31] : memref<8x512xf32, #tpu.memory_space<vmem>>, vector<8x512xf32>
    %cst_32 = arith.constant 0.000000e+00 : f32
    %49 = vector.broadcast %cst_32 : f32 to vector<16x512xf32>
    %cst_33 = arith.constant 0.000000e+00 : f32
    %50 = vector.broadcast %cst_33 : f32 to vector<16x8xf32>
    %cst_34 = arith.constant 0.000000e+00 : f32
    %51 = vector.broadcast %cst_34 : f32 to vector<16x8xf32>
    %cst_35 = arith.constant dense<0.000000e+00> : vector<16x512xf32>
    %52 = tpu.matmul %1, %44, %cst_35 {dimension_numbers = #tpu.dot_dimension_numbers<[1], [0], [0], [1], [0, 0, 1, 1], [], []>} : vector<16x50xf32>, vector<50x512xf32>, vector<16x512xf32> -> vector<16x512xf32>
    %cst_36 = arith.constant dense<0.000000e+00> : vector<16x512xf32>
    %53 = tpu.matmul %41, %45, %cst_36 {dimension_numbers = #tpu.dot_dimension_numbers<[1], [0], [0], [1], [0, 0, 1, 1], [], []>} : vector<16x8xf32>, vector<8x512xf32>, vector<16x512xf32> -> vector<16x512xf32>
    %54 = arith.mulf %52, %53 : vector<16x512xf32>
    %55 = arith.addf %49, %54 : vector<16x512xf32>
    %cst_37 = arith.constant dense<0.000000e+00> : vector<16x8xf32>
    %56 = tpu.matmul %1, %46, %cst_37 {dimension_numbers = #tpu.dot_dimension_numbers<[1], [0], [0], [1], [0, 0, 1, 1], [], []>} : vector<16x50xf32>, vector<50x8xf32>, vector<16x8xf32> -> vector<16x8xf32>
    %cst_38 = arith.constant dense<0.000000e+00> : vector<16x8xf32>
    %57 = tpu.matmul %41, %47, %cst_38 {dimension_numbers = #tpu.dot_dimension_numbers<[1], [0], [0], [1], [0, 0, 1, 1], [], []>} : vector<16x8xf32>, vector<8x8xf32>, vector<16x8xf32> -> vector<16x8xf32>
    %58 = arith.mulf %56, %57 : vector<16x8xf32>
    %59 = arith.addf %50, %58 : vector<16x8xf32>
    %60 = arith.mulf %56, %56 : vector<16x8xf32>
    %61 = arith.addf %51, %60 : vector<16x8xf32>
    %cst_39 = arith.constant dense<0.000000e+00> : vector<16x512xf32>
    %62 = tpu.matmul %3, %44, %cst_39 {dimension_numbers = #tpu.dot_dimension_numbers<[1], [0], [0], [1], [0, 0, 1, 1], [], []>} : vector<16x50xf32>, vector<50x512xf32>, vector<16x512xf32> -> vector<16x512xf32>
    %cst_40 = arith.constant dense<0.000000e+00> : vector<16x512xf32>
    %63 = tpu.matmul %42, %45, %cst_40 {dimension_numbers = #tpu.dot_dimension_numbers<[1], [0], [0], [1], [0, 0, 1, 1], [], []>} : vector<16x8xf32>, vector<8x512xf32>, vector<16x512xf32> -> vector<16x512xf32>
    %64 = arith.mulf %62, %63 : vector<16x512xf32>
    %65 = arith.addf %55, %64 : vector<16x512xf32>
    %cst_41 = arith.constant dense<0.000000e+00> : vector<16x8xf32>
    %66 = tpu.matmul %3, %46, %cst_41 {dimension_numbers = #tpu.dot_dimension_numbers<[1], [0], [0], [1], [0, 0, 1, 1], [], []>} : vector<16x50xf32>, vector<50x8xf32>, vector<16x8xf32> -> vector<16x8xf32>
    %cst_42 = arith.constant dense<0.000000e+00> : vector<16x8xf32>
    %67 = tpu.matmul %42, %47, %cst_42 {dimension_numbers = #tpu.dot_dimension_numbers<[1], [0], [0], [1], [0, 0, 1, 1], [], []>} : vector<16x8xf32>, vector<8x8xf32>, vector<16x8xf32> -> vector<16x8xf32>
    %68 = arith.mulf %66, %67 : vector<16x8xf32>
    %69 = arith.addf %59, %68 : vector<16x8xf32>
    %70 = arith.mulf %66, %66 : vector<16x8xf32>
    %71 = arith.addf %61, %70 : vector<16x8xf32>
    %cst_43 = arith.constant dense<0.000000e+00> : vector<16x512xf32>
    %72 = tpu.matmul %5, %44, %cst_43 {dimension_numbers = #tpu.dot_dimension_numbers<[1], [0], [0], [1], [0, 0, 1, 1], [], []>} : vector<16x50xf32>, vector<50x512xf32>, vector<16x512xf32> -> vector<16x512xf32>
    %cst_44 = arith.constant dense<0.000000e+00> : vector<16x512xf32>
    %73 = tpu.matmul %43, %45, %cst_44 {dimension_numbers = #tpu.dot_dimension_numbers<[1], [0], [0], [1], [0, 0, 1, 1], [], []>} : vector<16x8xf32>, vector<8x512xf32>, vector<16x512xf32> -> vector<16x512xf32>
    %74 = arith.mulf %72, %73 : vector<16x512xf32>
    %75 = arith.addf %65, %74 : vector<16x512xf32>
    %cst_45 = arith.constant dense<0.000000e+00> : vector<16x8xf32>
    %76 = tpu.matmul %5, %46, %cst_45 {dimension_numbers = #tpu.dot_dimension_numbers<[1], [0], [0], [1], [0, 0, 1, 1], [], []>} : vector<16x50xf32>, vector<50x8xf32>, vector<16x8xf32> -> vector<16x8xf32>
    %cst_46 = arith.constant dense<0.000000e+00> : vector<16x8xf32>
    %77 = tpu.matmul %43, %47, %cst_46 {dimension_numbers = #tpu.dot_dimension_numbers<[1], [0], [0], [1], [0, 0, 1, 1], [], []>} : vector<16x8xf32>, vector<8x8xf32>, vector<16x8xf32> -> vector<16x8xf32>
    %78 = arith.mulf %76, %77 : vector<16x8xf32>
    %79 = arith.addf %69, %78 : vector<16x8xf32>
    %80 = arith.mulf %76, %76 : vector<16x8xf32>
    %81 = arith.addf %71, %80 : vector<16x8xf32>
    %82 = math.sqrt %81 : vector<16x8xf32>
    %cst_47 = arith.constant 9.99999993E-9 : f32
    %83 = vector.broadcast %cst_47 : f32 to vector<16x8xf32>
    %84 = arith.addf %82, %83 : vector<16x8xf32>
    %85 = arith.divf %79, %84 : vector<16x8xf32>
    %cst_48 = arith.constant -1.000000e+00 : f32
    %cst_49 = arith.constant 1.000000e+00 : f32
    %86 = vector.broadcast %cst_48 : f32 to vector<16x8xf32>
    %87 = arith.maximumf %86, %85 : vector<16x8xf32>
    %88 = vector.broadcast %cst_49 : f32 to vector<16x8xf32>
    %89 = arith.minimumf %88, %87 : vector<16x8xf32>
    %90 = math.absf %89 : vector<16x8xf32>
    %91 = arith.mulf %89, %89 : vector<16x8xf32>
    %cst_50 = arith.constant -0.008656363 : f32
    %92 = vector.broadcast %cst_50 : f32 to vector<16x8xf32>
    %93 = arith.mulf %91, %92 : vector<16x8xf32>
    %cst_51 = arith.constant -0.0427434221 : f32
    %94 = vector.broadcast %cst_51 : f32 to vector<16x8xf32>
    %95 = arith.addf %94, %93 : vector<16x8xf32>
    %96 = arith.mulf %91, %95 : vector<16x8xf32>
    %cst_52 = arith.constant 0.166665867 : f32
    %97 = vector.broadcast %cst_52 : f32 to vector<16x8xf32>
    %98 = arith.addf %97, %96 : vector<16x8xf32>
    %99 = arith.mulf %91, %98 : vector<16x8xf32>
    %cst_53 = arith.constant -0.706629634 : f32
    %100 = vector.broadcast %cst_53 : f32 to vector<16x8xf32>
    %101 = arith.mulf %91, %100 : vector<16x8xf32>
    %cst_54 = arith.constant 1.000000e+00 : f32
    %102 = vector.broadcast %cst_54 : f32 to vector<16x8xf32>
    %103 = arith.addf %102, %101 : vector<16x8xf32>
    %104 = arith.divf %99, %103 : vector<16x8xf32>
    %105 = arith.mulf %89, %104 : vector<16x8xf32>
    %106 = arith.addf %89, %105 : vector<16x8xf32>
    %cst_55 = arith.constant 1.57079637 : f32
    %107 = vector.broadcast %cst_55 : f32 to vector<16x8xf32>
    %108 = arith.subf %107, %106 : vector<16x8xf32>
    %cst_56 = arith.constant 1.000000e+00 : f32
    %109 = vector.broadcast %cst_56 : f32 to vector<16x8xf32>
    %110 = arith.subf %109, %89 : vector<16x8xf32>
    %cst_57 = arith.constant 5.000000e-01 : f32
    %111 = vector.broadcast %cst_57 : f32 to vector<16x8xf32>
    %112 = arith.mulf %110, %111 : vector<16x8xf32>
    %113 = math.sqrt %112 : vector<16x8xf32>
    %cst_58 = arith.constant -0.008656363 : f32
    %114 = vector.broadcast %cst_58 : f32 to vector<16x8xf32>
    %115 = arith.mulf %112, %114 : vector<16x8xf32>
    %cst_59 = arith.constant -0.0427434221 : f32
    %116 = vector.broadcast %cst_59 : f32 to vector<16x8xf32>
    %117 = arith.addf %116, %115 : vector<16x8xf32>
    %118 = arith.mulf %112, %117 : vector<16x8xf32>
    %cst_60 = arith.constant 0.166665867 : f32
    %119 = vector.broadcast %cst_60 : f32 to vector<16x8xf32>
    %120 = arith.addf %119, %118 : vector<16x8xf32>
    %121 = arith.mulf %112, %120 : vector<16x8xf32>
    %cst_61 = arith.constant -0.706629634 : f32
    %122 = vector.broadcast %cst_61 : f32 to vector<16x8xf32>
    %123 = arith.mulf %112, %122 : vector<16x8xf32>
    %cst_62 = arith.constant 1.000000e+00 : f32
    %124 = vector.broadcast %cst_62 : f32 to vector<16x8xf32>
    %125 = arith.addf %124, %123 : vector<16x8xf32>
    %126 = arith.divf %121, %125 : vector<16x8xf32>
    %127 = arith.mulf %113, %126 : vector<16x8xf32>
    %128 = arith.addf %113, %127 : vector<16x8xf32>
    %cst_63 = arith.constant 2.000000e+00 : f32
    %129 = vector.broadcast %cst_63 : f32 to vector<16x8xf32>
    %130 = arith.mulf %129, %128 : vector<16x8xf32>
    %cst_64 = arith.constant 1.000000e+00 : f32
    %131 = vector.broadcast %cst_64 : f32 to vector<16x8xf32>
    %132 = arith.addf %131, %89 : vector<16x8xf32>
    %cst_65 = arith.constant 5.000000e-01 : f32
    %133 = vector.broadcast %cst_65 : f32 to vector<16x8xf32>
    %134 = arith.mulf %132, %133 : vector<16x8xf32>
    %135 = math.sqrt %134 : vector<16x8xf32>
    %cst_66 = arith.constant -0.008656363 : f32
    %136 = vector.broadcast %cst_66 : f32 to vector<16x8xf32>
    %137 = arith.mulf %134, %136 : vector<16x8xf32>
    %cst_67 = arith.constant -0.0427434221 : f32
    %138 = vector.broadcast %cst_67 : f32 to vector<16x8xf32>
    %139 = arith.addf %138, %137 : vector<16x8xf32>
    %140 = arith.mulf %134, %139 : vector<16x8xf32>
    %cst_68 = arith.constant 0.166665867 : f32
    %141 = vector.broadcast %cst_68 : f32 to vector<16x8xf32>
    %142 = arith.addf %141, %140 : vector<16x8xf32>
    %143 = arith.mulf %134, %142 : vector<16x8xf32>
    %cst_69 = arith.constant -0.706629634 : f32
    %144 = vector.broadcast %cst_69 : f32 to vector<16x8xf32>
    %145 = arith.mulf %134, %144 : vector<16x8xf32>
    %cst_70 = arith.constant 1.000000e+00 : f32
    %146 = vector.broadcast %cst_70 : f32 to vector<16x8xf32>
    %147 = arith.addf %146, %145 : vector<16x8xf32>
    %148 = arith.divf %143, %147 : vector<16x8xf32>
    %149 = arith.mulf %135, %148 : vector<16x8xf32>
    %150 = arith.addf %135, %149 : vector<16x8xf32>
    %cst_71 = arith.constant 2.000000e+00 : f32
    %151 = vector.broadcast %cst_71 : f32 to vector<16x8xf32>
    %152 = arith.mulf %151, %150 : vector<16x8xf32>
    %cst_72 = arith.constant 3.14159274 : f32
    %153 = vector.broadcast %cst_72 : f32 to vector<16x8xf32>
    %154 = arith.subf %153, %152 : vector<16x8xf32>
    %cst_73 = arith.constant 5.000000e-01 : f32
    %155 = vector.broadcast %cst_73 : f32 to vector<16x8xf32>
    %156 = arith.cmpf ole, %90, %155 : vector<16x8xf32>
    %cst_74 = arith.constant 5.000000e-01 : f32
    %157 = vector.broadcast %cst_74 : f32 to vector<16x8xf32>
    %158 = arith.cmpf ogt, %89, %157 : vector<16x8xf32>
    %159 = arith.select %158, %130, %154 : vector<16x8xi1>, vector<16x8xf32>
    %160 = arith.select %156, %108, %159 : vector<16x8xi1>, vector<16x8xf32>
    %cst_75 = arith.constant dense<0.000000e+00> : vector<16x512xf32>
    %161 = tpu.matmul %160, %48, %cst_75 {dimension_numbers = #tpu.dot_dimension_numbers<[1], [0], [0], [1], [0, 0, 1, 1], [], []>} : vector<16x8xf32>, vector<8x512xf32>, vector<16x512xf32> -> vector<16x512xf32>
    %162 = tpu.iota {dimensions = array<i32: 1>} : vector<1x512xi32>
    %c381_i32 = arith.constant 381 : i32
    %163 = vector.broadcast %c381_i32 : i32 to vector<1x512xi32>
    %164 = arith.cmpi sge, %162, %163 : vector<1x512xi32>
    %c389_i32 = arith.constant 389 : i32
    %165 = vector.broadcast %c389_i32 : i32 to vector<1x512xi32>
    %166 = arith.cmpi slt, %162, %165 : vector<1x512xi32>
    %167 = arith.andi %164, %166 : vector<1x512xi1>
    %c389_i32_76 = arith.constant 389 : i32
    %168 = vector.broadcast %c389_i32_76 : i32 to vector<1x512xi32>
    %169 = arith.cmpi sge, %162, %168 : vector<1x512xi32>
    %c392_i32 = arith.constant 392 : i32
    %170 = vector.broadcast %c392_i32 : i32 to vector<1x512xi32>
    %171 = arith.cmpi slt, %162, %170 : vector<1x512xi32>
    %172 = arith.andi %169, %171 : vector<1x512xi1>
    %c115_i32 = arith.constant 115 : i32
    %173 = vector.broadcast %c115_i32 : i32 to vector<1x512xi32>
    %174 = arith.cmpi slt, %162, %173 : vector<1x512xi32>
    %175 = arith.ori %174, %167 : vector<1x512xi1>
    %176 = vector.shape_cast %167 : vector<1x512xi1> to vector<1x512xi1>
    %177 = vector.broadcast %176 : vector<1x512xi1> to vector<16x512xi1>
    %178 = arith.select %177, %161, %75 : vector<16x512xi1>, vector<16x512xf32>
    %179 = tpu.iota {dimensions = array<i32: 0>} : vector<16x1xi32>
    %c8_i32 = arith.constant 8 : i32
    %180 = arith.muli %arg0, %c8_i32 : i32
    %c8_i32_77 = arith.constant 8 : i32
    %181 = arith.subi %180, %c8_i32_77 : i32
    %182 = vector.broadcast %181 : i32 to vector<16x1xi32>
    %183 = arith.addi %182, %179 : vector<16x1xi32>
    %c0_i32_78 = arith.constant 0 : i32
    %184 = vector.broadcast %c0_i32_78 : i32 to vector<16x1xi32>
    %185 = arith.cmpi eq, %183, %184 : vector<16x1xi32>
    %c7_i32 = arith.constant 7 : i32
    %186 = vector.broadcast %c7_i32 : i32 to vector<16x1xi32>
    %187 = arith.cmpi eq, %183, %186 : vector<16x1xi32>
    %c1_i32 = arith.constant 1 : i32
    %188 = tpu.dynamic_rotate %178 by %c1_i32 dim 0 : vector<16x512xf32>, i32 -> vector<16x512xf32>
    %c15_i32 = arith.constant 15 : i32
    %189 = tpu.dynamic_rotate %178 by %c15_i32 dim 0 : vector<16x512xf32>, i32 -> vector<16x512xf32>
    %190 = vector.broadcast %172 : vector<1x512xi1> to vector<16x512xi1>
    %191 = vector.broadcast %187 : vector<16x1xi1> to vector<16x512xi1>
    %192 = arith.andi %190, %191 : vector<16x512xi1>
    %193 = arith.select %192, %188, %178 : vector<16x512xi1>, vector<16x512xf32>
    %194 = arith.subf %189, %178 : vector<16x512xf32>
    %195 = arith.subf %178, %188 : vector<16x512xf32>
    %196 = vector.shape_cast %185 : vector<16x1xi1> to vector<16x1xi1>
    %197 = vector.broadcast %196 : vector<16x1xi1> to vector<16x512xi1>
    %198 = arith.select %197, %194, %195 : vector<16x512xi1>, vector<16x512xf32>
    %199 = vector.shape_cast %175 : vector<1x512xi1> to vector<1x512xi1>
    %200 = vector.broadcast %199 : vector<1x512xi1> to vector<16x512xi1>
    %201 = arith.select %200, %198, %193 : vector<16x512xi1>, vector<16x512xf32>
    %202 = math.absf %201 : vector<16x512xf32>
    %cst_79 = arith.constant 1.000000e-03 : f32
    %203 = vector.broadcast %cst_79 : f32 to vector<16x512xf32>
    %204 = arith.cmpf olt, %202, %203 : vector<16x512xf32>
    %cst_80 = arith.constant 0.000000e+00 : f32
    %205 = vector.broadcast %cst_80 : f32 to vector<16x512xf32>
    %206 = arith.select %204, %205, %201 : vector<16x512xi1>, vector<16x512xf32>
    %cst_81 = arith.constant 0.000000e+00 : f32
    %207 = vector.broadcast %cst_81 : f32 to vector<16x512xf32>
    %208 = arith.cmpf ogt, %206, %207 : vector<16x512xf32>
    %cst_82 = arith.constant 0.000000e+00 : f32
    %209 = vector.broadcast %cst_82 : f32 to vector<16x512xf32>
    %210 = arith.cmpf olt, %206, %209 : vector<16x512xf32>
    %cst_83 = arith.constant -1.000000e+00 : f32
    %cst_84 = arith.constant 0.000000e+00 : f32
    %211 = vector.broadcast %cst_83 : f32 to vector<16x512xf32>
    %212 = vector.broadcast %cst_84 : f32 to vector<16x512xf32>
    %213 = arith.select %210, %211, %212 : vector<16x512xi1>, vector<16x512xf32>
    %cst_85 = arith.constant 1.000000e+00 : f32
    %214 = vector.broadcast %cst_85 : f32 to vector<16x512xf32>
    %215 = arith.select %208, %214, %213 : vector<16x512xi1>, vector<16x512xf32>
    %216 = vector.extract_strided_slice %215 {offsets = [8, 0], sizes = [8, 512], strides = [1, 1]} : vector<16x512xf32> to vector<8x512xf32>
    %c0_86 = arith.constant 0 : index
    %c0_87 = arith.constant 0 : index
    %217 = vector.load %arg8[%c0_86, %c0_87] : memref<8x512xf32, #tpu.memory_space<vmem>>, vector<8x512xf32>
    tpu.vector_store %arg8[%c0_86, %c0_87], %216 {strides = array<i32>} : memref<8x512xf32, #tpu.memory_space<vmem>>, vector<8x512xf32>,
    return
  }
  func.func @transform_0(%arg0: i32) -> (i32, i32, i32, i32) {
    %c0_i32 = arith.constant 0 : i32
    %c0_i32_0 = arith.constant 0 : i32
    %c0_i32_1 = arith.constant 0 : i32
    %c0_i32_2 = arith.constant 0 : i32
    return %arg0, %c0_i32, %c0_i32_0, %c0_i32_1 : i32, i32, i32, i32
  }
  func.func @transform_1(%arg0: i32) -> (i32, i32) {
    %c0_i32 = arith.constant 0 : i32
    %c0_i32_0 = arith.constant 0 : i32
    %c0_i32_1 = arith.constant 0 : i32
    return %c0_i32, %c0_i32_0 : i32, i32
  }
  func.func @transform_2(%arg0: i32) -> (i32, i32) {
    %c0_i32 = arith.constant 0 : i32
    %c0_i32_0 = arith.constant 0 : i32
    %c0_i32_1 = arith.constant 0 : i32
    return %c0_i32, %c0_i32_0 : i32, i32
  }
  func.func @transform_3(%arg0: i32) -> (i32, i32, i32) {
    %c0_i32 = arith.constant 0 : i32
    %c0_i32_0 = arith.constant 0 : i32
    %c0_i32_1 = arith.constant 0 : i32
    %c0_i32_2 = arith.constant 0 : i32
    return %c0_i32, %c0_i32_0, %c0_i32_1 : i32, i32, i32
  }
  func.func @transform_4(%arg0: i32) -> (i32, i32) {
    %c0_i32 = arith.constant 0 : i32
    %c0_i32_0 = arith.constant 0 : i32
    %c0_i32_1 = arith.constant 0 : i32
    return %c0_i32, %c0_i32_0 : i32, i32
  }
  func.func @transform_5(%arg0: i32) -> (i32, i32) {
    %c0_i32 = arith.constant 0 : i32
    %c0_i32_0 = arith.constant 0 : i32
    %c0_i32_1 = arith.constant 0 : i32
    return %c0_i32, %c0_i32_0 : i32, i32
  }
  func.func @transform_6(%arg0: i32) -> (i32, i32) {
    %c0_i32 = arith.constant 0 : i32
    %c0_i32_0 = arith.constant 0 : i32
    %c0_i32_1 = arith.constant 0 : i32
    return %c0_i32, %c0_i32_0 : i32, i32
  }
  func.func @transform_7(%arg0: i32) -> (i32, i32) {
    %c0_i32 = arith.constant 0 : i32
    %c0_i32_0 = arith.constant 0 : i32
    return %arg0, %c0_i32 : i32, i32
  }
}

</mosaic_0001>

<llo_original>
// kernel: tpu_custom_call.1
$region0: #{tpu_custom_call.1}
  #allocation0 [shape = 'u32[]', space=smem, size = 0x4, offset = 0x4, fixed_abs, tag = 'smem constant byte address 0x4 - core index']
  #allocation1 [shape = 'u32[144,128]{1,0:T(1,128)}', space=vmem, size = 0x12000, scoped, tag = 'internal scratch']
  %s0 = inlined_call_operand.hbm [shape: f32[1,3,16,50], index: 0, kind: input, shape index: {}]
  %s1 = inlined_call_operand.vmem [shape: f32[50,512], index: 1, kind: input, shape index: {}]
  %s2 = inlined_call_operand.vmem [shape: f32[8,512], index: 2, kind: input, shape index: {}]
  %s3 = inlined_call_operand.vmem [shape: f32[3,50,8], index: 3, kind: input, shape index: {}]
  %s4 = inlined_call_operand.vmem [shape: f32[50,8], index: 4, kind: input, shape index: {}]
  %s5 = inlined_call_operand.vmem [shape: f32[8,8], index: 5, kind: input, shape index: {}]
  %s6 = inlined_call_operand.hbm [shape: f32[8,512], index: 6, kind: input, shape index: {}]
  %s7 = inlined_call_operand.hbm [shape: f32[8,512], index: 7, kind: output, shape index: {}]
  %s8 = sld [smem:[#allocation0]]
  $region46: #{tpu_custom_call.1} parent=0
    _
  %s10 = ssub.s32 1, %s8
  %s11 = scalar_select 0, %s10, %s8
  $region1: #{tpu_custom_call.1} parent=0
    #allocation2 [shape = 'u8[24576]{0}', space=vmem, size = 0x6000, scoped, tag = 'input window, operand 0, single buffered']
    #allocation3 [shape = 's32[1]{0}', space=sflag, size = 0x4, scoped, tag = 'scoped memory for tpu_custom_call.1']
    #allocation4 [shape = 's32[1]{0}', space=sflag, size = 0x4, scoped, tag = 'scoped memory for tpu_custom_call.1']
    #allocation5 [shape = 'u8[16384]{0}', space=vmem, size = 0x4000, scoped, tag = 'input window, operand 6, single buffered']
    #allocation6 [shape = 's32[1]{0}', space=sflag, size = 0x4, scoped, tag = 'scoped memory for tpu_custom_call.1']
    #allocation7 [shape = 'u8[16384]{0}', space=vmem, size = 0x4000, scoped, tag = 'output window, operand 0, single buffered']
    %12 = vsyncpa [#allocation3], 0
    %13 = vsyncpa [#allocation6], 0
    %14 = vsyncpa [#allocation4], 0
    // Predicated region
    $region2: #{tpu_custom_call.1} parent=1 // pred_check
      _
    $region3: #{tpu_custom_call.1} parent=1 // pred_check_branch
      %16 = sbr.rel (0) target = $region5
    $region4: #{tpu_custom_call.1} parent=1 // pred_region
      %s18 = ssub.s32 768, 768
      %19 = vsyncadd [#allocation3], %s18
      %s20 = sshll.u32 [#allocation2], 4
      %s21 = int_to_ptr.vmem [resolvable:$true] %s20
      %26 = dma.hbm_to_vmem [thread:$0]  %s0, 768, %s21, [#allocation3], 128, 128, 8
    $region5: #{tpu_custom_call.1} parent=1 // pred_fallthru
      _
    // Predicated region
    $region6: #{tpu_custom_call.1} parent=1 // pred_check
      _
    $region7: #{tpu_custom_call.1} parent=1 // pred_check_branch
      %28 = sbr.rel (0) target = $region9
    $region8: #{tpu_custom_call.1} parent=1 // pred_region
      _
    $region9: #{tpu_custom_call.1} parent=1 // pred_fallthru
      _
    // Predicated region
    $region10: #{tpu_custom_call.1} parent=1 // pred_check
      _
    $region11: #{tpu_custom_call.1} parent=1 // pred_check_branch
      %30 = sbr.rel (0) target = $region13
    $region12: #{tpu_custom_call.1} parent=1 // pred_region
      _
    $region13: #{tpu_custom_call.1} parent=1 // pred_fallthru
      _
    // Predicated region
    $region14: #{tpu_custom_call.1} parent=1 // pred_check
      _
    $region15: #{tpu_custom_call.1} parent=1 // pred_check_branch
      %32 = sbr.rel (0) target = $region17
    $region16: #{tpu_custom_call.1} parent=1 // pred_region
      _
    $region17: #{tpu_custom_call.1} parent=1 // pred_fallthru
      _
    // Predicated region
    $region18: #{tpu_custom_call.1} parent=1 // pred_check
      _
    $region19: #{tpu_custom_call.1} parent=1 // pred_check_branch
      %34 = sbr.rel (0) target = $region21
    $region20: #{tpu_custom_call.1} parent=1 // pred_region
      _
    $region21: #{tpu_custom_call.1} parent=1 // pred_fallthru
      _
    // Predicated region
    $region22: #{tpu_custom_call.1} parent=1 // pred_check
      _
    $region23: #{tpu_custom_call.1} parent=1 // pred_check_branch
      %36 = sbr.rel (0) target = $region25
    $region24: #{tpu_custom_call.1} parent=1 // pred_region
      _
    $region25: #{tpu_custom_call.1} parent=1 // pred_fallthru
      _
    // Predicated region
    $region26: #{tpu_custom_call.1} parent=1 // pred_check
      _
    $region27: #{tpu_custom_call.1} parent=1 // pred_check_branch
      %38 = sbr.rel (0) target = $region29
    $region28: #{tpu_custom_call.1} parent=1 // pred_region
      %s40 = ssub.s32 512, 512
      %41 = vsyncadd [#allocation6], %s40
      %s43 = sshll.u32 [#allocation5], 4
      %s44 = int_to_ptr.vmem [resolvable:$true] %s43
      %46 = dma.hbm_to_vmem [thread:$0]  %s6, 512, %s44, [#allocation6]
    $region29: #{tpu_custom_call.1} parent=1 // pred_fallthru
      _
    // Predicated region
    $region30: #{tpu_custom_call.1} parent=1 // pred_check
      _
    $region31: #{tpu_custom_call.1} parent=1 // pred_check_branch
      %48 = sbr.rel (0) target = $region33
    $region32: #{tpu_custom_call.1} parent=1 // pred_region
      %49 = dma.done [#allocation3], 768
    $region33: #{tpu_custom_call.1} parent=1 // pred_fallthru
      _
    // Predicated region
    $region34: #{tpu_custom_call.1} parent=1 // pred_check
      _
    $region35: #{tpu_custom_call.1} parent=1 // pred_check_branch
      %51 = sbr.rel (0) target = $region37
    $region36: #{tpu_custom_call.1} parent=1 // pred_region
      %52 = dma.done [#allocation6], 512
    $region37: #{tpu_custom_call.1} parent=1 // pred_fallthru
      _
    %v53 = vld [vmem:[#allocation2] sm:$0xff]
    %v54 = vld [vmem:[#allocation2 + $0x8] sm:$0xff]
    %s55 = scalar_lea.vmem [#allocation2], 16
    %v56 = vld [vmem:[%s55] sm:$0xff]
    %v57 = vld [vmem:[%s55 + $0x8] sm:$0xff]
    %s58 = scalar_lea.vmem [#allocation2], 32
    %v59 = vld [vmem:[%s58] sm:$0xff]
    %v60 = vld [vmem:[%s58 + $0x8] sm:$0xff]
    %v61 = vld [vmem:[%s3] sm:$0xff]
    %v62 = vld [vmem:[%s3 + $0x8] sm:$0xff]
    %v63 = vld [vmem:[%s3 + $0x10] sm:$0xff]
    %v64 = vld [vmem:[%s3 + $0x18] sm:$0xff]
    %v65 = vld [vmem:[%s3 + $0x20] sm:$0xff]
    %v66 = vld [vmem:[%s3 + $0x28] sm:$0xff]
    %v67 = vld [vmem:[%s3 + $0x30] sm:$0x3]
    %s68 = scalar_lea.vmem %s3, 56
    %v69 = vld [vmem:[%s68] sm:$0xff]
    %v70 = vld [vmem:[%s68 + $0x8] sm:$0xff]
    %v71 = vld [vmem:[%s68 + $0x10] sm:$0xff]
    %v72 = vld [vmem:[%s68 + $0x18] sm:$0xff]
    %v73 = vld [vmem:[%s68 + $0x20] sm:$0xff]
    %v74 = vld [vmem:[%s68 + $0x28] sm:$0xff]
    %v75 = vld [vmem:[%s68 + $0x30] sm:$0x3]
    %s76 = scalar_lea.vmem %s3, 112
    %v77 = vld [vmem:[%s76] sm:$0xff]
    %v78 = vld [vmem:[%s76 + $0x8] sm:$0xff]
    %v79 = vld [vmem:[%s76 + $0x10] sm:$0xff]
    %v80 = vld [vmem:[%s76 + $0x18] sm:$0xff]
    %v81 = vld [vmem:[%s76 + $0x20] sm:$0xff]
    %v82 = vld [vmem:[%s76 + $0x28] sm:$0xff]
    %v83 = vld [vmem:[%s76 + $0x30] sm:$0x3]
    %v84 = vlaneseq
    %v85 = vand.u32 %v84, 127
    %vm86 = vcmp.eq.s32.totalorder %v85, 3
    %v87 = vsel %vm86, 1, 0
    %v88 = vcvt.s32.f32 %v87
    %vm89 = vcmp.eq.s32.totalorder %v85, 0
    %v90 = vsel %vm89, 1, 0
    %v91 = vcvt.s32.f32 %v90
    %v92 = vadd.f32 %v88, %v91
    %vm93 = vcmask 408576
    %v95 = vsel %vm93, %v56, 0
    %v98 = vsel %vm93, %v57, 0
    %vm100 = vcmask 1041408
    %v102 = vsel %vm100, %v75, 0
    %104 = vmatprep.subr.mxu0 0.0
    %105 = vmatpush1.msra.mxu0 %v69
    %106 = vmatprep.subr.mxu0 0.0
    %107 = vmatpush1.msra.mxu0 %v70
    %108 = vmatprep.subr.mxu0 0.0
    %109 = vmatpush1.msra.mxu0 %v71
    %110 = vmatprep.subr.mxu0 0.0
    %111 = vmatpush1.msra.mxu0 %v72
    %112 = vmatprep.subr.mxu0 0.0
    %113 = vmatpush1.msra.mxu0 %v73
    %114 = vmatprep.subr.mxu0 0.0
    %115 = vmatpush1.msra.mxu0 %v74
    %116 = vmatprep.subr.mxu0 0.0
    %117 = vmatpush1.msra.mxu0 %v102
    %118 = vmatprep.subr.mxu0 0.0
    %119 = vmatpush1.msra.mxu0 0.0
    %120 = vmatprep.subr.mxu0 0.0
    %121 = vmatpush1.msra.mxu0 0.0
    %122 = vmatprep.subr.mxu0 0.0
    %123 = vmatpush1.msra.mxu0 0.0
    %124 = vmatprep.subr.mxu0 0.0
    %125 = vmatpush1.msra.mxu0 0.0
    %126 = vmatprep.subr.mxu0 0.0
    %127 = vmatpush1.msra.mxu0 0.0
    %128 = vmatprep.subr.mxu0 0.0
    %129 = vmatpush1.msra.mxu0 0.0
    %130 = vmatprep.subr.mxu0 0.0
    %131 = vmatpush1.msra.mxu0 0.0
    %132 = vmatprep.subr.mxu0 0.0
    %133 = vmatpush1.msra.mxu0 0.0
    %134 = vmatprep.subr.mxu0 0.0
    %135 = vmatpush1.msra.mxu0 0.0
    %136 = vmatprep.subr.mxu0 0.0
    %137 = vmatpush1.msra.mxu0 0.0
    %138 = vmatprep.subr.mxu0 0.0
    %139 = vmatpush1.msra.mxu0 0.0
    %140 = vmatprep.subr.mxu0 0.0
    %141 = vmatpush1.msra.mxu0 0.0
    %142 = vmatprep.subr.mxu0 0.0
    %143 = vmatpush1.msra.mxu0 0.0
    %144 = vmatprep.subr.mxu0 0.0
    %145 = vmatpush1.msra.mxu0 0.0
    %146 = vmatprep.subr.mxu0 0.0
    %147 = vmatpush1.msra.mxu0 0.0
    %148 = vmatprep.subr.mxu0 0.0
    %149 = vmatpush1.msra.mxu0 0.0
    %150 = vmatprep.subr.mxu0 0.0
    %151 = vmatpush1.msra.mxu0 0.0
    %152 = vmatprep.subr.mxu0 0.0
    %153 = vmatpush1.msra.mxu0 0.0
    %154 = vmatprep.subr.mxu0 0.0
    %155 = vmatpush1.msra.mxu0 0.0
    %156 = vmatprep.subr.mxu0 0.0
    %157 = vmatpush1.msra.mxu0 0.0
    %158 = vmatprep.subr.mxu0 0.0
    %159 = vmatpush1.msra.mxu0 0.0
    %160 = vmatprep.subr.mxu0 0.0
    %161 = vmatpush1.msra.mxu0 0.0
    %162 = vmatprep.subr.mxu0 0.0
    %163 = vmatpush1.msra.mxu0 0.0
    %164 = vmatprep.subr.mxu0 0.0
    %165 = vmatpush1.msra.mxu0 0.0
    %166 = vmatprep.subr.mxu0 0.0
    %167 = vmatpush1.msra.mxu0 0.0
    %168 = vmatprep.mubr.f32.mxu0 0.0
    %169 = vmatmul.mubr.f32.gmra.mrb[0].mxu0 %v95
    %v170 = vpop.f32.mrb[0].mxu0
    %v171 = vadd.f32 0.0, %v170
    %v172 = vpop.f32.mrb[0].mxu0
    %173 = vmatprep.mubr.f32.mxu0 0.0
    %174 = vmatmul.mubr.f32.gmra.mrb[0].mxu0 %v98
    %v175 = vpop.f32.mrb[0].mxu0
    %v176 = vadd.f32 0.0, %v175
    %v177 = vpop.f32.mrb[0].mxu0
    %178 = vdwg.mxu0
    %v180 = vsel %vm93, %v53, 0
    %v183 = vsel %vm93, %v54, 0
    %v186 = vsel %vm100, %v67, 0
    %188 = vmatprep.subr.mxu0 0.0
    %189 = vmatpush1.msra.mxu0 %v61
    %190 = vmatprep.subr.mxu0 0.0
    %191 = vmatpush1.msra.mxu0 %v62
    %192 = vmatprep.subr.mxu0 0.0
    %193 = vmatpush1.msra.mxu0 %v63
    %194 = vmatprep.subr.mxu0 0.0
    %195 = vmatpush1.msra.mxu0 %v64
    %196 = vmatprep.subr.mxu0 0.0
    %197 = vmatpush1.msra.mxu0 %v65
    %198 = vmatprep.subr.mxu0 0.0
    %199 = vmatpush1.msra.mxu0 %v66
    %200 = vmatprep.subr.mxu0 0.0
    %201 = vmatpush1.msra.mxu0 %v186
    %202 = vmatprep.subr.mxu0 0.0
    %203 = vmatpush1.msra.mxu0 0.0
    %204 = vmatprep.subr.mxu0 0.0
    %205 = vmatpush1.msra.mxu0 0.0
    %206 = vmatprep.subr.mxu0 0.0
    %207 = vmatpush1.msra.mxu0 0.0
    %208 = vmatprep.subr.mxu0 0.0
    %209 = vmatpush1.msra.mxu0 0.0
    %210 = vmatprep.subr.mxu0 0.0
    %211 = vmatpush1.msra.mxu0 0.0
    %212 = vmatprep.subr.mxu0 0.0
    %213 = vmatpush1.msra.mxu0 0.0
    %214 = vmatprep.subr.mxu0 0.0
    %215 = vmatpush1.msra.mxu0 0.0
    %216 = vmatprep.subr.mxu0 0.0
    %217 = vmatpush1.msra.mxu0 0.0
    %218 = vmatprep.subr.mxu0 0.0
    %219 = vmatpush1.msra.mxu0 0.0
    %220 = vmatprep.subr.mxu0 0.0
    %221 = vmatpush1.msra.mxu0 0.0
    %222 = vmatprep.subr.mxu0 0.0
    %223 = vmatpush1.msra.mxu0 0.0
    %224 = vmatprep.subr.mxu0 0.0
    %225 = vmatpush1.msra.mxu0 0.0
    %226 = vmatprep.subr.mxu0 0.0
    %227 = vmatpush1.msra.mxu0 0.0
    %228 = vmatprep.subr.mxu0 0.0
    %229 = vmatpush1.msra.mxu0 0.0
    %230 = vmatprep.subr.mxu0 0.0
    %231 = vmatpush1.msra.mxu0 0.0
    %232 = vmatprep.subr.mxu0 0.0
    %233 = vmatpush1.msra.mxu0 0.0
    %234 = vmatprep.subr.mxu0 0.0
    %235 = vmatpush1.msra.mxu0 0.0
    %236 = vmatprep.subr.mxu0 0.0
    %237 = vmatpush1.msra.mxu0 0.0
    %238 = vmatprep.subr.mxu0 0.0
    %239 = vmatpush1.msra.mxu0 0.0
    %240 = vmatprep.subr.mxu0 0.0
    %241 = vmatpush1.msra.mxu0 0.0
    %242 = vmatprep.subr.mxu0 0.0
    %243 = vmatpush1.msra.mxu0 0.0
    %244 = vmatprep.subr.mxu0 0.0
    %245 = vmatpush1.msra.mxu0 0.0
    %246 = vmatprep.subr.mxu0 0.0
    %247 = vmatpush1.msra.mxu0 0.0
    %248 = vmatprep.subr.mxu0 0.0
    %249 = vmatpush1.msra.mxu0 0.0
    %250 = vmatprep.subr.mxu0 0.0
    %251 = vmatpush1.msra.mxu0 0.0
    %252 = vmatprep.mubr.f32.mxu0 0.0
    %253 = vmatmul.mubr.f32.gmra.mrb[0].mxu0 %v180
    %v254 = vpop.f32.mrb[0].mxu0
    %v255 = vadd.f32 %v171, %v254
    %v256 = vpop.f32.mrb[0].mxu0
    %257 = vmatprep.mubr.f32.mxu0 0.0
    %258 = vmatmul.mubr.f32.gmra.mrb[0].mxu0 %v183
    %v259 = vpop.f32.mrb[0].mxu0
    %v260 = vadd.f32 %v176, %v259
    %v261 = vpop.f32.mrb[0].mxu0
    %262 = vdwg.mxu0
    %v263 = vadd.f32 %v255, %v88
    %v264 = vadd.f32 %v260, %v88
    %v266 = vsel %vm100, %v83, 0
    %268 = vmatprep.subr.mxu0 0.0
    %269 = vmatpush1.msra.mxu0 %v77
    %270 = vmatprep.subr.mxu0 0.0
    %271 = vmatpush1.msra.mxu0 %v78
    %272 = vmatprep.subr.mxu0 0.0
    %273 = vmatpush1.msra.mxu0 %v79
    %274 = vmatprep.subr.mxu0 0.0
    %275 = vmatpush1.msra.mxu0 %v80
    %276 = vmatprep.subr.mxu0 0.0
    %277 = vmatpush1.msra.mxu0 %v81
    %278 = vmatprep.subr.mxu0 0.0
    %279 = vmatpush1.msra.mxu0 %v82
    %280 = vmatprep.subr.mxu0 0.0
    %281 = vmatpush1.msra.mxu0 %v266
    %282 = vmatprep.subr.mxu0 0.0
    %283 = vmatpush1.msra.mxu0 0.0
    %284 = vmatprep.subr.mxu0 0.0
    %285 = vmatpush1.msra.mxu0 0.0
    %286 = vmatprep.subr.mxu0 0.0
    %287 = vmatpush1.msra.mxu0 0.0
    %288 = vmatprep.subr.mxu0 0.0
    %289 = vmatpush1.msra.mxu0 0.0
    %290 = vmatprep.subr.mxu0 0.0
    %291 = vmatpush1.msra.mxu0 0.0
    %292 = vmatprep.subr.mxu0 0.0
    %293 = vmatpush1.msra.mxu0 0.0
    %294 = vmatprep.subr.mxu0 0.0
    %295 = vmatpush1.msra.mxu0 0.0
    %296 = vmatprep.subr.mxu0 0.0
    %297 = vmatpush1.msra.mxu0 0.0
    %298 = vmatprep.subr.mxu0 0.0
    %299 = vmatpush1.msra.mxu0 0.0
    %300 = vmatprep.subr.mxu0 0.0
    %301 = vmatpush1.msra.mxu0 0.0
    %302 = vmatprep.subr.mxu0 0.0
    %303 = vmatpush1.msra.mxu0 0.0
    %304 = vmatprep.subr.mxu0 0.0
    %305 = vmatpush1.msra.mxu0 0.0
    %306 = vmatprep.subr.mxu0 0.0
    %307 = vmatpush1.msra.mxu0 0.0
    %308 = vmatprep.subr.mxu0 0.0
    %309 = vmatpush1.msra.mxu0 0.0
    %310 = vmatprep.subr.mxu0 0.0
    %311 = vmatpush1.msra.mxu0 0.0
    %312 = vmatprep.subr.mxu0 0.0
    %313 = vmatpush1.msra.mxu0 0.0
    %314 = vmatprep.subr.mxu0 0.0
    %315 = vmatpush1.msra.mxu0 0.0
    %316 = vmatprep.subr.mxu0 0.0
    %317 = vmatpush1.msra.mxu0 0.0
    %318 = vmatprep.subr.mxu0 0.0
    %319 = vmatpush1.msra.mxu0 0.0
    %320 = vmatprep.subr.mxu0 0.0
    %321 = vmatpush1.msra.mxu0 0.0
    %322 = vmatprep.subr.mxu0 0.0
    %323 = vmatpush1.msra.mxu0 0.0
    %324 = vmatprep.subr.mxu0 0.0
    %325 = vmatpush1.msra.mxu0 0.0
    %326 = vmatprep.subr.mxu0 0.0
    %327 = vmatpush1.msra.mxu0 0.0
    %328 = vmatprep.subr.mxu0 0.0
    %329 = vmatpush1.msra.mxu0 0.0
    %330 = vmatprep.subr.mxu0 0.0
    %331 = vmatpush1.msra.mxu0 0.0
    %332 = vmatprep.mubr.f32.mxu0 0.0
    %333 = vmatmul.mubr.f32.gmra.mrb[0].mxu0 %v180
    %v334 = vpop.f32.mrb[0].mxu0
    %v335 = vadd.f32 0.0, %v334
    %v336 = vpop.f32.mrb[0].mxu0
    %337 = vmatprep.mubr.f32.mxu0 0.0
    %338 = vmatmul.mubr.f32.gmra.mrb[0].mxu0 %v183
    %v339 = vpop.f32.mrb[0].mxu0
    %v340 = vadd.f32 0.0, %v339
    %v341 = vpop.f32.mrb[0].mxu0
    %342 = vdwg.mxu0
    %343 = vmatprep.subr.mxu0 0.0
    %344 = vmatpush1.msra.mxu0 %v61
    %345 = vmatprep.subr.mxu0 0.0
    %346 = vmatpush1.msra.mxu0 %v62
    %347 = vmatprep.subr.mxu0 0.0
    %348 = vmatpush1.msra.mxu0 %v63
    %349 = vmatprep.subr.mxu0 0.0
    %350 = vmatpush1.msra.mxu0 %v64
    %351 = vmatprep.subr.mxu0 0.0
    %352 = vmatpush1.msra.mxu0 %v65
    %353 = vmatprep.subr.mxu0 0.0
    %354 = vmatpush1.msra.mxu0 %v66
    %355 = vmatprep.subr.mxu0 0.0
    %356 = vmatpush1.msra.mxu0 %v186
    %357 = vmatprep.subr.mxu0 0.0
    %358 = vmatpush1.msra.mxu0 0.0
    %359 = vmatprep.subr.mxu0 0.0
    %360 = vmatpush1.msra.mxu0 0.0
    %361 = vmatprep.subr.mxu0 0.0
    %362 = vmatpush1.msra.mxu0 0.0
    %363 = vmatprep.subr.mxu0 0.0
    %364 = vmatpush1.msra.mxu0 0.0
    %365 = vmatprep.subr.mxu0 0.0
    %366 = vmatpush1.msra.mxu0 0.0
    %367 = vmatprep.subr.mxu0 0.0
    %368 = vmatpush1.msra.mxu0 0.0
    %369 = vmatprep.subr.mxu0 0.0
    %370 = vmatpush1.msra.mxu0 0.0
    %371 = vmatprep.subr.mxu0 0.0
    %372 = vmatpush1.msra.mxu0 0.0
    %373 = vmatprep.subr.mxu0 0.0
    %374 = vmatpush1.msra.mxu0 0.0
    %375 = vmatprep.subr.mxu0 0.0
    %376 = vmatpush1.msra.mxu0 0.0
    %377 = vmatprep.subr.mxu0 0.0
    %378 = vmatpush1.msra.mxu0 0.0
    %379 = vmatprep.subr.mxu0 0.0
    %380 = vmatpush1.msra.mxu0 0.0
    %381 = vmatprep.subr.mxu0 0.0
    %382 = vmatpush1.msra.mxu0 0.0
    %383 = vmatprep.subr.mxu0 0.0
    %384 = vmatpush1.msra.mxu0 0.0
    %385 = vmatprep.subr.mxu0 0.0
    %386 = vmatpush1.msra.mxu0 0.0
    %387 = vmatprep.subr.mxu0 0.0
    %388 = vmatpush1.msra.mxu0 0.0
    %389 = vmatprep.subr.mxu0 0.0
    %390 = vmatpush1.msra.mxu0 0.0
    %391 = vmatprep.subr.mxu0 0.0
    %392 = vmatpush1.msra.mxu0 0.0
    %393 = vmatprep.subr.mxu0 0.0
    %394 = vmatpush1.msra.mxu0 0.0
    %395 = vmatprep.subr.mxu0 0.0
    %396 = vmatpush1.msra.mxu0 0.0
    %397 = vmatprep.subr.mxu0 0.0
    %398 = vmatpush1.msra.mxu0 0.0
    %399 = vmatprep.subr.mxu0 0.0
    %400 = vmatpush1.msra.mxu0 0.0
    %401 = vmatprep.subr.mxu0 0.0
    %402 = vmatpush1.msra.mxu0 0.0
    %403 = vmatprep.subr.mxu0 0.0
    %404 = vmatpush1.msra.mxu0 0.0
    %405 = vmatprep.subr.mxu0 0.0
    %406 = vmatpush1.msra.mxu0 0.0
    %407 = vmatprep.mubr.f32.mxu0 0.0
    %408 = vmatmul.mubr.f32.gmra.mrb[0].mxu0 %v95
    %v409 = vpop.f32.mrb[0].mxu0
    %v410 = vadd.f32 %v335, %v409
    %v411 = vpop.f32.mrb[0].mxu0
    %412 = vmatprep.mubr.f32.mxu0 0.0
    %413 = vmatmul.mubr.f32.gmra.mrb[0].mxu0 %v98
    %v414 = vpop.f32.mrb[0].mxu0
    %v415 = vadd.f32 %v340, %v414
    %v416 = vpop.f32.mrb[0].mxu0
    %417 = vdwg.mxu0
    %v418 = vadd.f32 %v410, %v88
    %v419 = vadd.f32 %v415, %v88
    %v421 = vsel %vm93, %v59, 0
    %v424 = vsel %vm93, %v60, 0
    %426 = vmatprep.subr.mxu0 0.0
    %427 = vmatpush1.msra.mxu0 %v61
    %428 = vmatprep.subr.mxu0 0.0
    %429 = vmatpush1.msra.mxu0 %v62
    %430 = vmatprep.subr.mxu0 0.0
    %431 = vmatpush1.msra.mxu0 %v63
    %432 = vmatprep.subr.mxu0 0.0
    %433 = vmatpush1.msra.mxu0 %v64
    %434 = vmatprep.subr.mxu0 0.0
    %435 = vmatpush1.msra.mxu0 %v65
    %436 = vmatprep.subr.mxu0 0.0
    %437 = vmatpush1.msra.mxu0 %v66
    %438 = vmatprep.subr.mxu0 0.0
    %439 = vmatpush1.msra.mxu0 %v186
    %440 = vmatprep.subr.mxu0 0.0
    %441 = vmatpush1.msra.mxu0 0.0
    %442 = vmatprep.subr.mxu0 0.0
    %443 = vmatpush1.msra.mxu0 0.0
    %444 = vmatprep.subr.mxu0 0.0
    %445 = vmatpush1.msra.mxu0 0.0
    %446 = vmatprep.subr.mxu0 0.0
    %447 = vmatpush1.msra.mxu0 0.0
    %448 = vmatprep.subr.mxu0 0.0
    %449 = vmatpush1.msra.mxu0 0.0
    %450 = vmatprep.subr.mxu0 0.0
    %451 = vmatpush1.msra.mxu0 0.0
    %452 = vmatprep.subr.mxu0 0.0
    %453 = vmatpush1.msra.mxu0 0.0
    %454 = vmatprep.subr.mxu0 0.0
    %455 = vmatpush1.msra.mxu0 0.0
    %456 = vmatprep.subr.mxu0 0.0
    %457 = vmatpush1.msra.mxu0 0.0
    %458 = vmatprep.subr.mxu0 0.0
    %459 = vmatpush1.msra.mxu0 0.0
    %460 = vmatprep.subr.mxu0 0.0
    %461 = vmatpush1.msra.mxu0 0.0
    %462 = vmatprep.subr.mxu0 0.0
    %463 = vmatpush1.msra.mxu0 0.0
    %464 = vmatprep.subr.mxu0 0.0
    %465 = vmatpush1.msra.mxu0 0.0
    %466 = vmatprep.subr.mxu0 0.0
    %467 = vmatpush1.msra.mxu0 0.0
    %468 = vmatprep.subr.mxu0 0.0
    %469 = vmatpush1.msra.mxu0 0.0
    %470 = vmatprep.subr.mxu0 0.0
    %471 = vmatpush1.msra.mxu0 0.0
    %472 = vmatprep.subr.mxu0 0.0
    %473 = vmatpush1.msra.mxu0 0.0
    %474 = vmatprep.subr.mxu0 0.0
    %475 = vmatpush1.msra.mxu0 0.0
    %476 = vmatprep.subr.mxu0 0.0
    %477 = vmatpush1.msra.mxu0 0.0
    %478 = vmatprep.subr.mxu0 0.0
    %479 = vmatpush1.msra.mxu0 0.0
    %480 = vmatprep.subr.mxu0 0.0
    %481 = vmatpush1.msra.mxu0 0.0
    %482 = vmatprep.subr.mxu0 0.0
    %483 = vmatpush1.msra.mxu0 0.0
    %484 = vmatprep.subr.mxu0 0.0
    %485 = vmatpush1.msra.mxu0 0.0
    %486 = vmatprep.subr.mxu0 0.0
    %487 = vmatpush1.msra.mxu0 0.0
    %488 = vmatprep.subr.mxu0 0.0
    %489 = vmatpush1.msra.mxu0 0.0
    %490 = vmatprep.mubr.f32.mxu0 0.0
    %491 = vmatmul.mubr.f32.gmra.mrb[0].mxu0 %v421
    %v492 = vpop.f32.mrb[0].mxu0
    %v493 = vadd.f32 %v92, %v492
    %v494 = vpop.f32.mrb[0].mxu0
    %495 = vmatprep.mubr.f32.mxu0 0.0
    %496 = vmatmul.mubr.f32.gmra.mrb[0].mxu0 %v424
    %v497 = vpop.f32.mrb[0].mxu0
    %v498 = vadd.f32 %v92, %v497
    %v499 = vpop.f32.mrb[0].mxu0
    %500 = vdwg.mxu0
    %v501 = vmul.f32 %v263, %v263
    %v502 = vmul.f32 %v264, %v264
    %v503 = vmul.f32 %v418, %v418
    %v504 = vmul.f32 %v419, %v419
    %v505 = vadd.f32 %v501, %v503
    %v506 = vadd.f32 %v502, %v504
    %v507 = vmul.f32 %v493, %v493
    %v508 = vmul.f32 %v498, %v498
    %v509 = vadd.f32 %v505, %v507
    %v510 = vadd.f32 %v506, %v508
    %v511 = vrsqrt.pop %v509
    %v512 = vrsqrt.pop %v510
    %v513 = vmul.f32 %v263, %v511
    %v514 = vmul.f32 %v264, %v512
    %v515 = vmul.f32 %v418, %v511
    %v516 = vmul.f32 %v419, %v512
    %v517 = vmul.f32 %v493, %v511
    %v518 = vmul.f32 %v498, %v512
    %v519 = vld [vmem:[%s1] sm:$0xff]
    %v520 = vld [vmem:[%s1 + $0x8] sm:$0xff]
    %v521 = vld [vmem:[%s1 + $0x10] sm:$0xff]
    %v522 = vld [vmem:[%s1 + $0x18] sm:$0xff]
    %v523 = vld [vmem:[%s1 + $0x20] sm:$0xff]
    %v524 = vld [vmem:[%s1 + $0x28] sm:$0xff]
    %v525 = vld [vmem:[%s1 + $0x30] sm:$0xff]
    %v526 = vld [vmem:[%s1 + $0x38] sm:$0xff]
    %v527 = vld [vmem:[%s1 + $0x40] sm:$0xff]
    %v528 = vld [vmem:[%s1 + $0x48] sm:$0xff]
    %v529 = vld [vmem:[%s1 + $0x50] sm:$0xff]
    %v530 = vld [vmem:[%s1 + $0x58] sm:$0xff]
    %v531 = vld [vmem:[%s1 + $0x60] sm:$0xff]
    %v532 = vld [vmem:[%s1 + $0x68] sm:$0xff]
    %v533 = vld [vmem:[%s1 + $0x70] sm:$0xff]
    %v534 = vld [vmem:[%s1 + $0x78] sm:$0xff]
    %v535 = vld [vmem:[%s1 + $0x80] sm:$0xff]
    %v536 = vld [vmem:[%s1 + $0x88] sm:$0xff]
    %v537 = vld [vmem:[%s1 + $0x90] sm:$0xff]
    %v538 = vld [vmem:[%s1 + $0x98] sm:$0xff]
    %v539 = vld [vmem:[%s1 + $0xa0] sm:$0xff]
    %v540 = vld [vmem:[%s1 + $0xa8] sm:$0xff]
    %v541 = vld [vmem:[%s1 + $0xb0] sm:$0xff]
    %v542 = vld [vmem:[%s1 + $0xb8] sm:$0xff]
    %v543 = vld [vmem:[%s1 + $0xc0] sm:$0x3]
    %v544 = vld [vmem:[%s1 + $0xc8] sm:$0x3]
    %v545 = vld [vmem:[%s1 + $0xd0] sm:$0x3]
    %v546 = vld [vmem:[%s1 + $0xd8] sm:$0x3]
    %v547 = vld [vmem:[%s2] sm:$0xff]
    %v548 = vld [vmem:[%s2 + $0x8] sm:$0xff]
    %v549 = vld [vmem:[%s2 + $0x10] sm:$0xff]
    %v550 = vld [vmem:[%s2 + $0x18] sm:$0xff]
    %v551 = vld [vmem:[%s4] sm:$0xff]
    %v552 = vld [vmem:[%s4 + $0x8] sm:$0xff]
    %v553 = vld [vmem:[%s4 + $0x10] sm:$0xff]
    %v554 = vld [vmem:[%s4 + $0x18] sm:$0xff]
    %v555 = vld [vmem:[%s4 + $0x20] sm:$0xff]
    %v556 = vld [vmem:[%s4 + $0x28] sm:$0xff]
    %v557 = vld [vmem:[%s4 + $0x30] sm:$0x3]
    %v558 = vld [vmem:[%s5] sm:$0xff]
    %v559 = vld [vmem:[#allocation5] sm:$0xff]
    %v560 = vld [vmem:[#allocation5 + $0x8] sm:$0xff]
    %v561 = vld [vmem:[#allocation5 + $0x10] sm:$0xff]
    %v562 = vld [vmem:[#allocation5 + $0x18] sm:$0xff]
    %v564 = vsel %vm100, %v543, 0
    %v567 = vsel %vm100, %v544, 0
    %v570 = vsel %vm100, %v545, 0
    %v573 = vsel %vm100, %v546, 0
    %575 = vmatprep.subr.mxu0 %v520
    %576 = vmatpush1.msra.mxu0 %v519
    %577 = vmatprep.subr.mxu0 %v524
    %578 = vmatpush1.msra.mxu0 %v523
    %579 = vmatprep.subr.mxu0 %v528
    %580 = vmatpush1.msra.mxu0 %v527
    %581 = vmatprep.subr.mxu0 %v532
    %582 = vmatpush1.msra.mxu0 %v531
    %583 = vmatprep.subr.mxu0 %v536
    %584 = vmatpush1.msra.mxu0 %v535
    %585 = vmatprep.subr.mxu0 %v540
    %586 = vmatpush1.msra.mxu0 %v539
    %587 = vmatprep.subr.mxu0 %v567
    %588 = vmatpush1.msra.mxu0 %v564
    %589 = vmatprep.subr.mxu0 0.0
    %590 = vmatpush1.msra.mxu0 0.0
    %591 = vmatprep.subr.mxu0 0.0
    %592 = vmatpush1.msra.mxu0 0.0
    %593 = vmatprep.subr.mxu0 0.0
    %594 = vmatpush1.msra.mxu0 0.0
    %595 = vmatprep.subr.mxu0 0.0
    %596 = vmatpush1.msra.mxu0 0.0
    %597 = vmatprep.subr.mxu0 0.0
    %598 = vmatpush1.msra.mxu0 0.0
    %599 = vmatprep.subr.mxu0 0.0
    %600 = vmatpush1.msra.mxu0 0.0
    %601 = vmatprep.subr.mxu0 0.0
    %602 = vmatpush1.msra.mxu0 0.0
    %603 = vmatprep.subr.mxu0 0.0
    %604 = vmatpush1.msra.mxu0 0.0
    %605 = vmatprep.subr.mxu0 0.0
    %606 = vmatpush1.msra.mxu0 0.0
    %607 = vmatprep.subr.mxu0 0.0
    %608 = vmatpush1.msra.mxu0 0.0
    %609 = vmatprep.subr.mxu0 0.0
    %610 = vmatpush1.msra.mxu0 0.0
    %611 = vmatprep.subr.mxu0 0.0
    %612 = vmatpush1.msra.mxu0 0.0
    %613 = vmatprep.subr.mxu0 0.0
    %614 = vmatpush1.msra.mxu0 0.0
    %615 = vmatprep.subr.mxu0 0.0
    %616 = vmatpush1.msra.mxu0 0.0
    %617 = vmatprep.subr.mxu0 0.0
    %618 = vmatpush1.msra.mxu0 0.0
    %619 = vmatprep.subr.mxu0 0.0
    %620 = vmatpush1.msra.mxu0 0.0
    %621 = vmatprep.subr.mxu0 0.0
    %622 = vmatpush1.msra.mxu0 0.0
    %623 = vmatprep.subr.mxu0 0.0
    %624 = vmatpush1.msra.mxu0 0.0
    %625 = vmatprep.subr.mxu0 0.0
    %626 = vmatpush1.msra.mxu0 0.0
    %627 = vmatprep.subr.mxu0 0.0
    %628 = vmatpush1.msra.mxu0 0.0
    %629 = vmatprep.subr.mxu0 0.0
    %630 = vmatpush1.msra.mxu0 0.0
    %631 = vmatprep.subr.mxu0 0.0
    %632 = vmatpush1.msra.mxu0 0.0
    %633 = vmatprep.subr.mxu0 0.0
    %634 = vmatpush1.msra.mxu0 0.0
    %635 = vmatprep.subr.mxu0 0.0
    %636 = vmatpush1.msra.mxu0 0.0
    %637 = vmatprep.subr.mxu0 0.0
    %638 = vmatpush1.msra.mxu0 0.0
    %639 = vmatprep.mubr.f32.mxu0 0.0
    %640 = vmatmul.mubr.f32.gmra.mrb[0].mxu0 %v180
    %v641 = vpop.f32.mrb[0].mxu0
    %v642 = vadd.f32 0.0, %v641
    %v643 = vpop.f32.mrb[0].mxu0
    %v644 = vadd.f32 0.0, %v643
    %645 = vmatprep.mubr.f32.mxu0 0.0
    %646 = vmatmul.mubr.f32.gmra.mrb[0].mxu0 %v183
    %v647 = vpop.f32.mrb[0].mxu0
    %v648 = vadd.f32 0.0, %v647
    %v649 = vpop.f32.mrb[0].mxu0
    %v650 = vadd.f32 0.0, %v649
    %651 = vdwg.mxu0
    %652 = vmatprep.subr.mxu0 %v522
    %653 = vmatpush1.msra.mxu0 %v521
    %654 = vmatprep.subr.mxu0 %v526
    %655 = vmatpush1.msra.mxu0 %v525
    %656 = vmatprep.subr.mxu0 %v530
    %657 = vmatpush1.msra.mxu0 %v529
    %658 = vmatprep.subr.mxu0 %v534
    %659 = vmatpush1.msra.mxu0 %v533
    %660 = vmatprep.subr.mxu0 %v538
    %661 = vmatpush1.msra.mxu0 %v537
    %662 = vmatprep.subr.mxu0 %v542
    %663 = vmatpush1.msra.mxu0 %v541
    %664 = vmatprep.subr.mxu0 %v573
    %665 = vmatpush1.msra.mxu0 %v570
    %666 = vmatprep.subr.mxu0 0.0
    %667 = vmatpush1.msra.mxu0 0.0
    %668 = vmatprep.subr.mxu0 0.0
    %669 = vmatpush1.msra.mxu0 0.0
    %670 = vmatprep.subr.mxu0 0.0
    %671 = vmatpush1.msra.mxu0 0.0
    %672 = vmatprep.subr.mxu0 0.0
    %673 = vmatpush1.msra.mxu0 0.0
    %674 = vmatprep.subr.mxu0 0.0
    %675 = vmatpush1.msra.mxu0 0.0
    %676 = vmatprep.subr.mxu0 0.0
    %677 = vmatpush1.msra.mxu0 0.0
    %678 = vmatprep.subr.mxu0 0.0
    %679 = vmatpush1.msra.mxu0 0.0
    %680 = vmatprep.subr.mxu0 0.0
    %681 = vmatpush1.msra.mxu0 0.0
    %682 = vmatprep.subr.mxu0 0.0
    %683 = vmatpush1.msra.mxu0 0.0
    %684 = vmatprep.subr.mxu0 0.0
    %685 = vmatpush1.msra.mxu0 0.0
    %686 = vmatprep.subr.mxu0 0.0
    %687 = vmatpush1.msra.mxu0 0.0
    %688 = vmatprep.subr.mxu0 0.0
    %689 = vmatpush1.msra.mxu0 0.0
    %690 = vmatprep.subr.mxu0 0.0
    %691 = vmatpush1.msra.mxu0 0.0
    %692 = vmatprep.subr.mxu0 0.0
    %693 = vmatpush1.msra.mxu0 0.0
    %694 = vmatprep.subr.mxu0 0.0
    %695 = vmatpush1.msra.mxu0 0.0
    %696 = vmatprep.subr.mxu0 0.0
    %697 = vmatpush1.msra.mxu0 0.0
    %698 = vmatprep.subr.mxu0 0.0
    %699 = vmatpush1.msra.mxu0 0.0
    %700 = vmatprep.subr.mxu0 0.0
    %701 = vmatpush1.msra.mxu0 0.0
    %702 = vmatprep.subr.mxu0 0.0
    %703 = vmatpush1.msra.mxu0 0.0
    %704 = vmatprep.subr.mxu0 0.0
    %705 = vmatpush1.msra.mxu0 0.0
    %706 = vmatprep.subr.mxu0 0.0
    %707 = vmatpush1.msra.mxu0 0.0
    %708 = vmatprep.subr.mxu0 0.0
    %709 = vmatpush1.msra.mxu0 0.0
    %710 = vmatprep.subr.mxu0 0.0
    %711 = vmatpush1.msra.mxu0 0.0
    %712 = vmatprep.subr.mxu0 0.0
    %713 = vmatpush1.msra.mxu0 0.0
    %714 = vmatprep.subr.mxu0 0.0
    %715 = vmatpush1.msra.mxu0 0.0
    %716 = vmatprep.mubr.f32.mxu0 0.0
    %717 = vmatmul.mubr.f32.gmra.mrb[0].mxu0 %v180
    %v718 = vpop.f32.mrb[0].mxu0
    %v719 = vadd.f32 0.0, %v718
    %v720 = vpop.f32.mrb[0].mxu0
    %v721 = vadd.f32 0.0, %v720
    %722 = vmatprep.mubr.f32.mxu0 0.0
    %723 = vmatmul.mubr.f32.gmra.mrb[0].mxu0 %v183
    %v724 = vpop.f32.mrb[0].mxu0
    %v725 = vadd.f32 0.0, %v724
    %v726 = vpop.f32.mrb[0].mxu0
    %v727 = vadd.f32 0.0, %v726
    %728 = vdwg.mxu0
    %vm729 = vcmask 64512
    %v731 = vsel %vm729, %v513, 0
    %v734 = vsel %vm729, %v514, 0
    %736 = vmatprep.subr.mxu0 %v548
    %737 = vmatpush1.msra.mxu0 %v547
    %738 = vmatprep.subr.mxu0 0.0
    %739 = vmatpush1.msra.mxu0 0.0
    %740 = vmatprep.subr.mxu0 0.0
    %741 = vmatpush1.msra.mxu0 0.0
    %742 = vmatprep.subr.mxu0 0.0
    %743 = vmatpush1.msra.mxu0 0.0
    %744 = vmatprep.subr.mxu0 0.0
    %745 = vmatpush1.msra.mxu0 0.0
    %746 = vmatprep.subr.mxu0 0.0
    %747 = vmatpush1.msra.mxu0 0.0
    %748 = vmatprep.subr.mxu0 0.0
    %749 = vmatpush1.msra.mxu0 0.0
    %750 = vmatprep.subr.mxu0 0.0
    %751 = vmatpush1.msra.mxu0 0.0
    %752 = vmatprep.subr.mxu0 0.0
    %753 = vmatpush1.msra.mxu0 0.0
    %754 = vmatprep.subr.mxu0 0.0
    %755 = vmatpush1.msra.mxu0 0.0
    %756 = vmatprep.subr.mxu0 0.0
    %757 = vmatpush1.msra.mxu0 0.0
    %758 = vmatprep.subr.mxu0 0.0
    %759 = vmatpush1.msra.mxu0 0.0
    %760 = vmatprep.subr.mxu0 0.0
    %761 = vmatpush1.msra.mxu0 0.0
    %762 = vmatprep.subr.mxu0 0.0
    %763 = vmatpush1.msra.mxu0 0.0
    %764 = vmatprep.subr.mxu0 0.0
    %765 = vmatpush1.msra.mxu0 0.0
    %766 = vmatprep.subr.mxu0 0.0
    %767 = vmatpush1.msra.mxu0 0.0
    %768 = vmatprep.subr.mxu0 0.0
    %769 = vmatpush1.msra.mxu0 0.0
    %770 = vmatprep.subr.mxu0 0.0
    %771 = vmatpush1.msra.mxu0 0.0
    %772 = vmatprep.subr.mxu0 0.0
    %773 = vmatpush1.msra.mxu0 0.0
    %774 = vmatprep.subr.mxu0 0.0
    %775 = vmatpush1.msra.mxu0 0.0
    %776 = vmatprep.subr.mxu0 0.0
    %777 = vmatpush1.msra.mxu0 0.0
    %778 = vmatprep.subr.mxu0 0.0
    %779 = vmatpush1.msra.mxu0 0.0
    %780 = vmatprep.subr.mxu0 0.0
    %781 = vmatpush1.msra.mxu0 0.0
    %782 = vmatprep.subr.mxu0 0.0
    %783 = vmatpush1.msra.mxu0 0.0
    %784 = vmatprep.subr.mxu0 0.0
    %785 = vmatpush1.msra.mxu0 0.0
    %786 = vmatprep.subr.mxu0 0.0
    %787 = vmatpush1.msra.mxu0 0.0
    %788 = vmatprep.subr.mxu0 0.0
    %789 = vmatpush1.msra.mxu0 0.0
    %790 = vmatprep.subr.mxu0 0.0
    %791 = vmatpush1.msra.mxu0 0.0
    %792 = vmatprep.subr.mxu0 0.0
    %793 = vmatpush1.msra.mxu0 0.0
    %794 = vmatprep.subr.mxu0 0.0
    %795 = vmatpush1.msra.mxu0 0.0
    %796 = vmatprep.subr.mxu0 0.0
    %797 = vmatpush1.msra.mxu0 0.0
    %798 = vmatprep.subr.mxu0 0.0
    %799 = vmatpush1.msra.mxu0 0.0
    %800 = vmatprep.mubr.f32.mxu0 0.0
    %801 = vmatmul.mubr.f32.gmra.mrb[0].mxu0 %v731
    %v802 = vpop.f32.mrb[0].mxu0
    %v803 = vadd.f32 0.0, %v802
    %v804 = vpop.f32.mrb[0].mxu0
    %v805 = vadd.f32 0.0, %v804
    %806 = vmatprep.mubr.f32.mxu0 0.0
    %807 = vmatmul.mubr.f32.gmra.mrb[0].mxu0 %v734
    %v808 = vpop.f32.mrb[0].mxu0
    %v809 = vadd.f32 0.0, %v808
    %v810 = vpop.f32.mrb[0].mxu0
    %v811 = vadd.f32 0.0, %v810
    %812 = vdwg.mxu0
    %813 = vmatprep.subr.mxu0 %v550
    %814 = vmatpush1.msra.mxu0 %v549
    %815 = vmatprep.subr.mxu0 0.0
    %816 = vmatpush1.msra.mxu0 0.0
    %817 = vmatprep.subr.mxu0 0.0
    %818 = vmatpush1.msra.mxu0 0.0
    %819 = vmatprep.subr.mxu0 0.0
    %820 = vmatpush1.msra.mxu0 0.0
    %821 = vmatprep.subr.mxu0 0.0
    %822 = vmatpush1.msra.mxu0 0.0
    %823 = vmatprep.subr.mxu0 0.0
    %824 = vmatpush1.msra.mxu0 0.0
    %825 = vmatprep.subr.mxu0 0.0
    %826 = vmatpush1.msra.mxu0 0.0
    %827 = vmatprep.subr.mxu0 0.0
    %828 = vmatpush1.msra.mxu0 0.0
    %829 = vmatprep.subr.mxu0 0.0
    %830 = vmatpush1.msra.mxu0 0.0
    %831 = vmatprep.subr.mxu0 0.0
    %832 = vmatpush1.msra.mxu0 0.0
    %833 = vmatprep.subr.mxu0 0.0
    %834 = vmatpush1.msra.mxu0 0.0
    %835 = vmatprep.subr.mxu0 0.0
    %836 = vmatpush1.msra.mxu0 0.0
    %837 = vmatprep.subr.mxu0 0.0
    %838 = vmatpush1.msra.mxu0 0.0
    %839 = vmatprep.subr.mxu0 0.0
    %840 = vmatpush1.msra.mxu0 0.0
    %841 = vmatprep.subr.mxu0 0.0
    %842 = vmatpush1.msra.mxu0 0.0
    %843 = vmatprep.subr.mxu0 0.0
    %844 = vmatpush1.msra.mxu0 0.0
    %845 = vmatprep.subr.mxu0 0.0
    %846 = vmatpush1.msra.mxu0 0.0
    %847 = vmatprep.subr.mxu0 0.0
    %848 = vmatpush1.msra.mxu0 0.0
    %849 = vmatprep.subr.mxu0 0.0
    %850 = vmatpush1.msra.mxu0 0.0
    %851 = vmatprep.subr.mxu0 0.0
    %852 = vmatpush1.msra.mxu0 0.0
    %853 = vmatprep.subr.mxu0 0.0
    %854 = vmatpush1.msra.mxu0 0.0
    %855 = vmatprep.subr.mxu0 0.0
    %856 = vmatpush1.msra.mxu0 0.0
    %857 = vmatprep.subr.mxu0 0.0
    %858 = vmatpush1.msra.mxu0 0.0
    %859 = vmatprep.subr.mxu0 0.0
    %860 = vmatpush1.msra.mxu0 0.0
    %861 = vmatprep.subr.mxu0 0.0
    %862 = vmatpush1.msra.mxu0 0.0
    %863 = vmatprep.subr.mxu0 0.0
    %864 = vmatpush1.msra.mxu0 0.0
    %865 = vmatprep.subr.mxu0 0.0
    %866 = vmatpush1.msra.mxu0 0.0
    %867 = vmatprep.subr.mxu0 0.0
    %868 = vmatpush1.msra.mxu0 0.0
    %869 = vmatprep.subr.mxu0 0.0
    %870 = vmatpush1.msra.mxu0 0.0
    %871 = vmatprep.subr.mxu0 0.0
    %872 = vmatpush1.msra.mxu0 0.0
    %873 = vmatprep.subr.mxu0 0.0
    %874 = vmatpush1.msra.mxu0 0.0
    %875 = vmatprep.subr.mxu0 0.0
    %876 = vmatpush1.msra.mxu0 0.0
    %877 = vmatprep.mubr.f32.mxu0 0.0
    %878 = vmatmul.mubr.f32.gmra.mrb[0].mxu0 %v731
    %v879 = vpop.f32.mrb[0].mxu0
    %v880 = vadd.f32 0.0, %v879
    %v881 = vpop.f32.mrb[0].mxu0
    %v882 = vadd.f32 0.0, %v881
    %883 = vmatprep.mubr.f32.mxu0 0.0
    %884 = vmatmul.mubr.f32.gmra.mrb[0].mxu0 %v734
    %v885 = vpop.f32.mrb[0].mxu0
    %v886 = vadd.f32 0.0, %v885
    %v887 = vpop.f32.mrb[0].mxu0
    %v888 = vadd.f32 0.0, %v887
    %889 = vdwg.mxu0
    %v890 = vmul.f32 %v642, %v803
    %v891 = vmul.f32 %v644, %v805
    %v892 = vmul.f32 %v719, %v880
    %v893 = vmul.f32 %v721, %v882
    %v894 = vmul.f32 %v648, %v809
    %v895 = vmul.f32 %v650, %v811
    %v896 = vmul.f32 %v725, %v886
    %v897 = vmul.f32 %v727, %v888
    %v898 = vadd.f32 %v890, 0.0
    %v899 = vadd.f32 %v891, 0.0
    %v900 = vadd.f32 %v892, 0.0
    %v901 = vadd.f32 %v893, 0.0
    %v902 = vadd.f32 %v894, 0.0
    %v903 = vadd.f32 %v895, 0.0
    %v904 = vadd.f32 %v896, 0.0
    %v905 = vadd.f32 %v897, 0.0
    %v907 = vsel %vm100, %v557, 0
    %909 = vmatprep.subr.mxu0 0.0
    %910 = vmatpush1.msra.mxu0 %v551
    %911 = vmatprep.subr.mxu0 0.0
    %912 = vmatpush1.msra.mxu0 %v552
    %913 = vmatprep.subr.mxu0 0.0
    %914 = vmatpush1.msra.mxu0 %v553
    %915 = vmatprep.subr.mxu0 0.0
    %916 = vmatpush1.msra.mxu0 %v554
    %917 = vmatprep.subr.mxu0 0.0
    %918 = vmatpush1.msra.mxu0 %v555
    %919 = vmatprep.subr.mxu0 0.0
    %920 = vmatpush1.msra.mxu0 %v556
    %921 = vmatprep.subr.mxu0 0.0
    %922 = vmatpush1.msra.mxu0 %v907
    %923 = vmatprep.subr.mxu0 0.0
    %924 = vmatpush1.msra.mxu0 0.0
    %925 = vmatprep.subr.mxu0 0.0
    %926 = vmatpush1.msra.mxu0 0.0
    %927 = vmatprep.subr.mxu0 0.0
    %928 = vmatpush1.msra.mxu0 0.0
    %929 = vmatprep.subr.mxu0 0.0
    %930 = vmatpush1.msra.mxu0 0.0
    %931 = vmatprep.subr.mxu0 0.0
    %932 = vmatpush1.msra.mxu0 0.0
    %933 = vmatprep.subr.mxu0 0.0
    %934 = vmatpush1.msra.mxu0 0.0
    %935 = vmatprep.subr.mxu0 0.0
    %936 = vmatpush1.msra.mxu0 0.0
    %937 = vmatprep.subr.mxu0 0.0
    %938 = vmatpush1.msra.mxu0 0.0
    %939 = vmatprep.subr.mxu0 0.0
    %940 = vmatpush1.msra.mxu0 0.0
    %941 = vmatprep.subr.mxu0 0.0
    %942 = vmatpush1.msra.mxu0 0.0
    %943 = vmatprep.subr.mxu0 0.0
    %944 = vmatpush1.msra.mxu0 0.0
    %945 = vmatprep.subr.mxu0 0.0
    %946 = vmatpush1.msra.mxu0 0.0
    %947 = vmatprep.subr.mxu0 0.0
    %948 = vmatpush1.msra.mxu0 0.0
    %949 = vmatprep.subr.mxu0 0.0
    %950 = vmatpush1.msra.mxu0 0.0
    %951 = vmatprep.subr.mxu0 0.0
    %952 = vmatpush1.msra.mxu0 0.0
    %953 = vmatprep.subr.mxu0 0.0
    %954 = vmatpush1.msra.mxu0 0.0
    %955 = vmatprep.subr.mxu0 0.0
    %956 = vmatpush1.msra.mxu0 0.0
    %957 = vmatprep.subr.mxu0 0.0
    %958 = vmatpush1.msra.mxu0 0.0
    %959 = vmatprep.subr.mxu0 0.0
    %960 = vmatpush1.msra.mxu0 0.0
    %961 = vmatprep.subr.mxu0 0.0
    %962 = vmatpush1.msra.mxu0 0.0
    %963 = vmatprep.subr.mxu0 0.0
    %964 = vmatpush1.msra.mxu0 0.0
    %965 = vmatprep.subr.mxu0 0.0
    %966 = vmatpush1.msra.mxu0 0.0
    %967 = vmatprep.subr.mxu0 0.0
    %968 = vmatpush1.msra.mxu0 0.0
    %969 = vmatprep.subr.mxu0 0.0
    %970 = vmatpush1.msra.mxu0 0.0
    %971 = vmatprep.subr.mxu0 0.0
    %972 = vmatpush1.msra.mxu0 0.0
    %973 = vmatprep.mubr.f32.mxu0 0.0
    %974 = vmatmul.mubr.f32.gmra.mrb[0].mxu0 %v180
    %v975 = vpop.f32.mrb[0].mxu0
    %v976 = vadd.f32 0.0, %v975
    %v977 = vpop.f32.mrb[0].mxu0
    %978 = vmatprep.mubr.f32.mxu0 0.0
    %979 = vmatmul.mubr.f32.gmra.mrb[0].mxu0 %v183
    %v980 = vpop.f32.mrb[0].mxu0
    %v981 = vadd.f32 0.0, %v980
    %v982 = vpop.f32.mrb[0].mxu0
    %983 = vdwg.mxu0
    %984 = vmatprep.subr.mxu0 0.0
    %985 = vmatpush1.msra.mxu0 %v558
    %986 = vmatprep.subr.mxu0 0.0
    %987 = vmatpush1.msra.mxu0 0.0
    %988 = vmatprep.subr.mxu0 0.0
    %989 = vmatpush1.msra.mxu0 0.0
    %990 = vmatprep.subr.mxu0 0.0
    %991 = vmatpush1.msra.mxu0 0.0
    %992 = vmatprep.subr.mxu0 0.0
    %993 = vmatpush1.msra.mxu0 0.0
    %994 = vmatprep.subr.mxu0 0.0
    %995 = vmatpush1.msra.mxu0 0.0
    %996 = vmatprep.subr.mxu0 0.0
    %997 = vmatpush1.msra.mxu0 0.0
    %998 = vmatprep.subr.mxu0 0.0
    %999 = vmatpush1.msra.mxu0 0.0
    %1000 = vmatprep.subr.mxu0 0.0
    %1001 = vmatpush1.msra.mxu0 0.0
    %1002 = vmatprep.subr.mxu0 0.0
    %1003 = vmatpush1.msra.mxu0 0.0
    %1004 = vmatprep.subr.mxu0 0.0
    %1005 = vmatpush1.msra.mxu0 0.0
    %1006 = vmatprep.subr.mxu0 0.0
    %1007 = vmatpush1.msra.mxu0 0.0
    %1008 = vmatprep.subr.mxu0 0.0
    %1009 = vmatpush1.msra.mxu0 0.0
    %1010 = vmatprep.subr.mxu0 0.0
    %1011 = vmatpush1.msra.mxu0 0.0
    %1012 = vmatprep.subr.mxu0 0.0
    %1013 = vmatpush1.msra.mxu0 0.0
    %1014 = vmatprep.subr.mxu0 0.0
    %1015 = vmatpush1.msra.mxu0 0.0
    %1016 = vmatprep.subr.mxu0 0.0
    %1017 = vmatpush1.msra.mxu0 0.0
    %1018 = vmatprep.subr.mxu0 0.0
    %1019 = vmatpush1.msra.mxu0 0.0
    %1020 = vmatprep.subr.mxu0 0.0
    %1021 = vmatpush1.msra.mxu0 0.0
    %1022 = vmatprep.subr.mxu0 0.0
    %1023 = vmatpush1.msra.mxu0 0.0
    %1024 = vmatprep.subr.mxu0 0.0
    %1025 = vmatpush1.msra.mxu0 0.0
    %1026 = vmatprep.subr.mxu0 0.0
    %1027 = vmatpush1.msra.mxu0 0.0
    %1028 = vmatprep.subr.mxu0 0.0
    %1029 = vmatpush1.msra.mxu0 0.0
    %1030 = vmatprep.subr.mxu0 0.0
    %1031 = vmatpush1.msra.mxu0 0.0
    %1032 = vmatprep.subr.mxu0 0.0
    %1033 = vmatpush1.msra.mxu0 0.0
    %1034 = vmatprep.subr.mxu0 0.0
    %1035 = vmatpush1.msra.mxu0 0.0
    %1036 = vmatprep.subr.mxu0 0.0
    %1037 = vmatpush1.msra.mxu0 0.0
    %1038 = vmatprep.subr.mxu0 0.0
    %1039 = vmatpush1.msra.mxu0 0.0
    %1040 = vmatprep.subr.mxu0 0.0
    %1041 = vmatpush1.msra.mxu0 0.0
    %1042 = vmatprep.subr.mxu0 0.0
    %1043 = vmatpush1.msra.mxu0 0.0
    %1044 = vmatprep.subr.mxu0 0.0
    %1045 = vmatpush1.msra.mxu0 0.0
    %1046 = vmatprep.subr.mxu0 0.0
    %1047 = vmatpush1.msra.mxu0 0.0
    %1048 = vmatprep.mubr.f32.mxu0 0.0
    %1049 = vmatmul.mubr.f32.gmra.mrb[0].mxu0 %v731
    %v1050 = vpop.f32.mrb[0].mxu0
    %v1051 = vadd.f32 0.0, %v1050
    %v1052 = vpop.f32.mrb[0].mxu0
    %1053 = vmatprep.mubr.f32.mxu0 0.0
    %1054 = vmatmul.mubr.f32.gmra.mrb[0].mxu0 %v734
    %v1055 = vpop.f32.mrb[0].mxu0
    %v1056 = vadd.f32 0.0, %v1055
    %v1057 = vpop.f32.mrb[0].mxu0
    %1058 = vdwg.mxu0
    %v1059 = vmul.f32 %v976, %v1051
    %v1060 = vmul.f32 %v981, %v1056
    %v1061 = vadd.f32 %v1059, 0.0
    %v1062 = vadd.f32 %v1060, 0.0
    %v1063 = vmul.f32 %v976, %v976
    %v1064 = vmul.f32 %v981, %v981
    %v1065 = vadd.f32 %v1063, 0.0
    %v1066 = vadd.f32 %v1064, 0.0
    %1067 = vmatprep.subr.mxu0 %v520
    %1068 = vmatpush1.msra.mxu0 %v519
    %1069 = vmatprep.subr.mxu0 %v524
    %1070 = vmatpush1.msra.mxu0 %v523
    %1071 = vmatprep.subr.mxu0 %v528
    %1072 = vmatpush1.msra.mxu0 %v527
    %1073 = vmatprep.subr.mxu0 %v532
    %1074 = vmatpush1.msra.mxu0 %v531
    %1075 = vmatprep.subr.mxu0 %v536
    %1076 = vmatpush1.msra.mxu0 %v535
    %1077 = vmatprep.subr.mxu0 %v540
    %1078 = vmatpush1.msra.mxu0 %v539
    %1079 = vmatprep.subr.mxu0 %v567
    %1080 = vmatpush1.msra.mxu0 %v564
    %1081 = vmatprep.subr.mxu0 0.0
    %1082 = vmatpush1.msra.mxu0 0.0
    %1083 = vmatprep.subr.mxu0 0.0
    %1084 = vmatpush1.msra.mxu0 0.0
    %1085 = vmatprep.subr.mxu0 0.0
    %1086 = vmatpush1.msra.mxu0 0.0
    %1087 = vmatprep.subr.mxu0 0.0
    %1088 = vmatpush1.msra.mxu0 0.0
    %1089 = vmatprep.subr.mxu0 0.0
    %1090 = vmatpush1.msra.mxu0 0.0
    %1091 = vmatprep.subr.mxu0 0.0
    %1092 = vmatpush1.msra.mxu0 0.0
    %1093 = vmatprep.subr.mxu0 0.0
    %1094 = vmatpush1.msra.mxu0 0.0
    %1095 = vmatprep.subr.mxu0 0.0
    %1096 = vmatpush1.msra.mxu0 0.0
    %1097 = vmatprep.subr.mxu0 0.0
    %1098 = vmatpush1.msra.mxu0 0.0
    %1099 = vmatprep.subr.mxu0 0.0
    %1100 = vmatpush1.msra.mxu0 0.0
    %1101 = vmatprep.subr.mxu0 0.0
    %1102 = vmatpush1.msra.mxu0 0.0
    %1103 = vmatprep.subr.mxu0 0.0
    %1104 = vmatpush1.msra.mxu0 0.0
    %1105 = vmatprep.subr.mxu0 0.0
    %1106 = vmatpush1.msra.mxu0 0.0
    %1107 = vmatprep.subr.mxu0 0.0
    %1108 = vmatpush1.msra.mxu0 0.0
    %1109 = vmatprep.subr.mxu0 0.0
    %1110 = vmatpush1.msra.mxu0 0.0
    %1111 = vmatprep.subr.mxu0 0.0
    %1112 = vmatpush1.msra.mxu0 0.0
    %1113 = vmatprep.subr.mxu0 0.0
    %1114 = vmatpush1.msra.mxu0 0.0
    %1115 = vmatprep.subr.mxu0 0.0
    %1116 = vmatpush1.msra.mxu0 0.0
    %1117 = vmatprep.subr.mxu0 0.0
    %1118 = vmatpush1.msra.mxu0 0.0
    %1119 = vmatprep.subr.mxu0 0.0
    %1120 = vmatpush1.msra.mxu0 0.0
    %1121 = vmatprep.subr.mxu0 0.0
    %1122 = vmatpush1.msra.mxu0 0.0
    %1123 = vmatprep.subr.mxu0 0.0
    %1124 = vmatpush1.msra.mxu0 0.0
    %1125 = vmatprep.subr.mxu0 0.0
    %1126 = vmatpush1.msra.mxu0 0.0
    %1127 = vmatprep.subr.mxu0 0.0
    %1128 = vmatpush1.msra.mxu0 0.0
    %1129 = vmatprep.subr.mxu0 0.0
    %1130 = vmatpush1.msra.mxu0 0.0
    %1131 = vmatprep.mubr.f32.mxu0 0.0
    %1132 = vmatmul.mubr.f32.gmra.mrb[0].mxu0 %v95
    %v1133 = vpop.f32.mrb[0].mxu0
    %v1134 = vadd.f32 0.0, %v1133
    %v1135 = vpop.f32.mrb[0].mxu0
    %v1136 = vadd.f32 0.0, %v1135
    %1137 = vmatprep.mubr.f32.mxu0 0.0
    %1138 = vmatmul.mubr.f32.gmra.mrb[0].mxu0 %v98
    %v1139 = vpop.f32.mrb[0].mxu0
    %v1140 = vadd.f32 0.0, %v1139
    %v1141 = vpop.f32.mrb[0].mxu0
    %v1142 = vadd.f32 0.0, %v1141
    %1143 = vdwg.mxu0
    %1144 = vmatprep.subr.mxu0 %v522
    %1145 = vmatpush1.msra.mxu0 %v521
    %1146 = vmatprep.subr.mxu0 %v526
    %1147 = vmatpush1.msra.mxu0 %v525
    %1148 = vmatprep.subr.mxu0 %v530
    %1149 = vmatpush1.msra.mxu0 %v529
    %1150 = vmatprep.subr.mxu0 %v534
    %1151 = vmatpush1.msra.mxu0 %v533
    %1152 = vmatprep.subr.mxu0 %v538
    %1153 = vmatpush1.msra.mxu0 %v537
    %1154 = vmatprep.subr.mxu0 %v542
    %1155 = vmatpush1.msra.mxu0 %v541
    %1156 = vmatprep.subr.mxu0 %v573
    %1157 = vmatpush1.msra.mxu0 %v570
    %1158 = vmatprep.subr.mxu0 0.0
    %1159 = vmatpush1.msra.mxu0 0.0
    %1160 = vmatprep.subr.mxu0 0.0
    %1161 = vmatpush1.msra.mxu0 0.0
    %1162 = vmatprep.subr.mxu0 0.0
    %1163 = vmatpush1.msra.mxu0 0.0
    %1164 = vmatprep.subr.mxu0 0.0
    %1165 = vmatpush1.msra.mxu0 0.0
    %1166 = vmatprep.subr.mxu0 0.0
    %1167 = vmatpush1.msra.mxu0 0.0
    %1168 = vmatprep.subr.mxu0 0.0
    %1169 = vmatpush1.msra.mxu0 0.0
    %1170 = vmatprep.subr.mxu0 0.0
    %1171 = vmatpush1.msra.mxu0 0.0
    %1172 = vmatprep.subr.mxu0 0.0
    %1173 = vmatpush1.msra.mxu0 0.0
    %1174 = vmatprep.subr.mxu0 0.0
    %1175 = vmatpush1.msra.mxu0 0.0
    %1176 = vmatprep.subr.mxu0 0.0
    %1177 = vmatpush1.msra.mxu0 0.0
    %1178 = vmatprep.subr.mxu0 0.0
    %1179 = vmatpush1.msra.mxu0 0.0
    %1180 = vmatprep.subr.mxu0 0.0
    %1181 = vmatpush1.msra.mxu0 0.0
    %1182 = vmatprep.subr.mxu0 0.0
    %1183 = vmatpush1.msra.mxu0 0.0
    %1184 = vmatprep.subr.mxu0 0.0
    %1185 = vmatpush1.msra.mxu0 0.0
    %1186 = vmatprep.subr.mxu0 0.0
    %1187 = vmatpush1.msra.mxu0 0.0
    %1188 = vmatprep.subr.mxu0 0.0
    %1189 = vmatpush1.msra.mxu0 0.0
    %1190 = vmatprep.subr.mxu0 0.0
    %1191 = vmatpush1.msra.mxu0 0.0
    %1192 = vmatprep.subr.mxu0 0.0
    %1193 = vmatpush1.msra.mxu0 0.0
    %1194 = vmatprep.subr.mxu0 0.0
    %1195 = vmatpush1.msra.mxu0 0.0
    %1196 = vmatprep.subr.mxu0 0.0
    %1197 = vmatpush1.msra.mxu0 0.0
    %1198 = vmatprep.subr.mxu0 0.0
    %1199 = vmatpush1.msra.mxu0 0.0
    %1200 = vmatprep.subr.mxu0 0.0
    %1201 = vmatpush1.msra.mxu0 0.0
    %1202 = vmatprep.subr.mxu0 0.0
    %1203 = vmatpush1.msra.mxu0 0.0
    %1204 = vmatprep.subr.mxu0 0.0
    %1205 = vmatpush1.msra.mxu0 0.0
    %1206 = vmatprep.subr.mxu0 0.0
    %1207 = vmatpush1.msra.mxu0 0.0
    %1208 = vmatprep.mubr.f32.mxu0 0.0
    %1209 = vmatmul.mubr.f32.gmra.mrb[0].mxu0 %v95
    %v1210 = vpop.f32.mrb[0].mxu0
    %v1211 = vadd.f32 0.0, %v1210
    %v1212 = vpop.f32.mrb[0].mxu0
    %v1213 = vadd.f32 0.0, %v1212
    %1214 = vmatprep.mubr.f32.mxu0 0.0
    %1215 = vmatmul.mubr.f32.gmra.mrb[0].mxu0 %v98
    %v1216 = vpop.f32.mrb[0].mxu0
    %v1217 = vadd.f32 0.0, %v1216
    %v1218 = vpop.f32.mrb[0].mxu0
    %v1219 = vadd.f32 0.0, %v1218
    %1220 = vdwg.mxu0
    %v1222 = vsel %vm729, %v515, 0
    %v1225 = vsel %vm729, %v516, 0
    %1227 = vmatprep.subr.mxu0 %v548
    %1228 = vmatpush1.msra.mxu0 %v547
    %1229 = vmatprep.subr.mxu0 0.0
    %1230 = vmatpush1.msra.mxu0 0.0
    %1231 = vmatprep.subr.mxu0 0.0
    %1232 = vmatpush1.msra.mxu0 0.0
    %1233 = vmatprep.subr.mxu0 0.0
    %1234 = vmatpush1.msra.mxu0 0.0
    %1235 = vmatprep.subr.mxu0 0.0
    %1236 = vmatpush1.msra.mxu0 0.0
    %1237 = vmatprep.subr.mxu0 0.0
    %1238 = vmatpush1.msra.mxu0 0.0
    %1239 = vmatprep.subr.mxu0 0.0
    %1240 = vmatpush1.msra.mxu0 0.0
    %1241 = vmatprep.subr.mxu0 0.0
    %1242 = vmatpush1.msra.mxu0 0.0
    %1243 = vmatprep.subr.mxu0 0.0
    %1244 = vmatpush1.msra.mxu0 0.0
    %1245 = vmatprep.subr.mxu0 0.0
    %1246 = vmatpush1.msra.mxu0 0.0
    %1247 = vmatprep.subr.mxu0 0.0
    %1248 = vmatpush1.msra.mxu0 0.0
    %1249 = vmatprep.subr.mxu0 0.0
    %1250 = vmatpush1.msra.mxu0 0.0
    %1251 = vmatprep.subr.mxu0 0.0
    %1252 = vmatpush1.msra.mxu0 0.0
    %1253 = vmatprep.subr.mxu0 0.0
    %1254 = vmatpush1.msra.mxu0 0.0
    %1255 = vmatprep.subr.mxu0 0.0
    %1256 = vmatpush1.msra.mxu0 0.0
    %1257 = vmatprep.subr.mxu0 0.0
    %1258 = vmatpush1.msra.mxu0 0.0
    %1259 = vmatprep.subr.mxu0 0.0
    %1260 = vmatpush1.msra.mxu0 0.0
    %1261 = vmatprep.subr.mxu0 0.0
    %1262 = vmatpush1.msra.mxu0 0.0
    %1263 = vmatprep.subr.mxu0 0.0
    %1264 = vmatpush1.msra.mxu0 0.0
    %1265 = vmatprep.subr.mxu0 0.0
    %1266 = vmatpush1.msra.mxu0 0.0
    %1267 = vmatprep.subr.mxu0 0.0
    %1268 = vmatpush1.msra.mxu0 0.0
    %1269 = vmatprep.subr.mxu0 0.0
    %1270 = vmatpush1.msra.mxu0 0.0
    %1271 = vmatprep.subr.mxu0 0.0
    %1272 = vmatpush1.msra.mxu0 0.0
    %1273 = vmatprep.subr.mxu0 0.0
    %1274 = vmatpush1.msra.mxu0 0.0
    %1275 = vmatprep.subr.mxu0 0.0
    %1276 = vmatpush1.msra.mxu0 0.0
    %1277 = vmatprep.subr.mxu0 0.0
    %1278 = vmatpush1.msra.mxu0 0.0
    %1279 = vmatprep.subr.mxu0 0.0
    %1280 = vmatpush1.msra.mxu0 0.0
    %1281 = vmatprep.subr.mxu0 0.0
    %1282 = vmatpush1.msra.mxu0 0.0
    %1283 = vmatprep.subr.mxu0 0.0
    %1284 = vmatpush1.msra.mxu0 0.0
    %1285 = vmatprep.subr.mxu0 0.0
    %1286 = vmatpush1.msra.mxu0 0.0
    %1287 = vmatprep.subr.mxu0 0.0
    %1288 = vmatpush1.msra.mxu0 0.0
    %1289 = vmatprep.subr.mxu0 0.0
    %1290 = vmatpush1.msra.mxu0 0.0
    %1291 = vmatprep.mubr.f32.mxu0 0.0
    %1292 = vmatmul.mubr.f32.gmra.mrb[0].mxu0 %v1222
    %v1293 = vpop.f32.mrb[0].mxu0
    %v1294 = vadd.f32 0.0, %v1293
    %v1295 = vpop.f32.mrb[0].mxu0
    %v1296 = vadd.f32 0.0, %v1295
    %1297 = vmatprep.mubr.f32.mxu0 0.0
    %1298 = vmatmul.mubr.f32.gmra.mrb[0].mxu0 %v1225
    %v1299 = vpop.f32.mrb[0].mxu0
    %v1300 = vadd.f32 0.0, %v1299
    %v1301 = vpop.f32.mrb[0].mxu0
    %v1302 = vadd.f32 0.0, %v1301
    %1303 = vdwg.mxu0
    %1304 = vmatprep.subr.mxu0 %v550
    %1305 = vmatpush1.msra.mxu0 %v549
    %1306 = vmatprep.subr.mxu0 0.0
    %1307 = vmatpush1.msra.mxu0 0.0
    %1308 = vmatprep.subr.mxu0 0.0
    %1309 = vmatpush1.msra.mxu0 0.0
    %1310 = vmatprep.subr.mxu0 0.0
    %1311 = vmatpush1.msra.mxu0 0.0
    %1312 = vmatprep.subr.mxu0 0.0
    %1313 = vmatpush1.msra.mxu0 0.0
    %1314 = vmatprep.subr.mxu0 0.0
    %1315 = vmatpush1.msra.mxu0 0.0
    %1316 = vmatprep.subr.mxu0 0.0
    %1317 = vmatpush1.msra.mxu0 0.0
    %1318 = vmatprep.subr.mxu0 0.0
    %1319 = vmatpush1.msra.mxu0 0.0
    %1320 = vmatprep.subr.mxu0 0.0
    %1321 = vmatpush1.msra.mxu0 0.0
    %1322 = vmatprep.subr.mxu0 0.0
    %1323 = vmatpush1.msra.mxu0 0.0
    %1324 = vmatprep.subr.mxu0 0.0
    %1325 = vmatpush1.msra.mxu0 0.0
    %1326 = vmatprep.subr.mxu0 0.0
    %1327 = vmatpush1.msra.mxu0 0.0
    %1328 = vmatprep.subr.mxu0 0.0
    %1329 = vmatpush1.msra.mxu0 0.0
    %1330 = vmatprep.subr.mxu0 0.0
    %1331 = vmatpush1.msra.mxu0 0.0
    %1332 = vmatprep.subr.mxu0 0.0
    %1333 = vmatpush1.msra.mxu0 0.0
    %1334 = vmatprep.subr.mxu0 0.0
    %1335 = vmatpush1.msra.mxu0 0.0
    %1336 = vmatprep.subr.mxu0 0.0
    %1337 = vmatpush1.msra.mxu0 0.0
    %1338 = vmatprep.subr.mxu0 0.0
    %1339 = vmatpush1.msra.mxu0 0.0
    %1340 = vmatprep.subr.mxu0 0.0
    %1341 = vmatpush1.msra.mxu0 0.0
    %1342 = vmatprep.subr.mxu0 0.0
    %1343 = vmatpush1.msra.mxu0 0.0
    %1344 = vmatprep.subr.mxu0 0.0
    %1345 = vmatpush1.msra.mxu0 0.0
    %1346 = vmatprep.subr.mxu0 0.0
    %1347 = vmatpush1.msra.mxu0 0.0
    %1348 = vmatprep.subr.mxu0 0.0
    %1349 = vmatpush1.msra.mxu0 0.0
    %1350 = vmatprep.subr.mxu0 0.0
    %1351 = vmatpush1.msra.mxu0 0.0
    %1352 = vmatprep.subr.mxu0 0.0
    %1353 = vmatpush1.msra.mxu0 0.0
    %1354 = vmatprep.subr.mxu0 0.0
    %1355 = vmatpush1.msra.mxu0 0.0
    %1356 = vmatprep.subr.mxu0 0.0
    %1357 = vmatpush1.msra.mxu0 0.0
    %1358 = vmatprep.subr.mxu0 0.0
    %1359 = vmatpush1.msra.mxu0 0.0
    %1360 = vmatprep.subr.mxu0 0.0
    %1361 = vmatpush1.msra.mxu0 0.0
    %1362 = vmatprep.subr.mxu0 0.0
    %1363 = vmatpush1.msra.mxu0 0.0
    %1364 = vmatprep.subr.mxu0 0.0
    %1365 = vmatpush1.msra.mxu0 0.0
    %1366 = vmatprep.subr.mxu0 0.0
    %1367 = vmatpush1.msra.mxu0 0.0
    %1368 = vmatprep.mubr.f32.mxu0 0.0
    %1369 = vmatmul.mubr.f32.gmra.mrb[0].mxu0 %v1222
    %v1370 = vpop.f32.mrb[0].mxu0
    %v1371 = vadd.f32 0.0, %v1370
    %v1372 = vpop.f32.mrb[0].mxu0
    %v1373 = vadd.f32 0.0, %v1372
    %1374 = vmatprep.mubr.f32.mxu0 0.0
    %1375 = vmatmul.mubr.f32.gmra.mrb[0].mxu0 %v1225
    %v1376 = vpop.f32.mrb[0].mxu0
    %v1377 = vadd.f32 0.0, %v1376
    %v1378 = vpop.f32.mrb[0].mxu0
    %v1379 = vadd.f32 0.0, %v1378
    %1380 = vdwg.mxu0
    %v1381 = vmul.f32 %v1134, %v1294
    %v1382 = vmul.f32 %v1136, %v1296
    %v1383 = vmul.f32 %v1211, %v1371
    %v1384 = vmul.f32 %v1213, %v1373
    %v1385 = vmul.f32 %v1140, %v1300
    %v1386 = vmul.f32 %v1142, %v1302
    %v1387 = vmul.f32 %v1217, %v1377
    %v1388 = vmul.f32 %v1219, %v1379
    %v1389 = vadd.f32 %v898, %v1381
    %v1390 = vadd.f32 %v899, %v1382
    %v1391 = vadd.f32 %v900, %v1383
    %v1392 = vadd.f32 %v901, %v1384
    %v1393 = vadd.f32 %v902, %v1385
    %v1394 = vadd.f32 %v903, %v1386
    %v1395 = vadd.f32 %v904, %v1387
    %v1396 = vadd.f32 %v905, %v1388
    %1397 = vmatprep.subr.mxu0 0.0
    %1398 = vmatpush1.msra.mxu0 %v551
    %1399 = vmatprep.subr.mxu0 0.0
    %1400 = vmatpush1.msra.mxu0 %v552
    %1401 = vmatprep.subr.mxu0 0.0
    %1402 = vmatpush1.msra.mxu0 %v553
    %1403 = vmatprep.subr.mxu0 0.0
    %1404 = vmatpush1.msra.mxu0 %v554
    %1405 = vmatprep.subr.mxu0 0.0
    %1406 = vmatpush1.msra.mxu0 %v555
    %1407 = vmatprep.subr.mxu0 0.0
    %1408 = vmatpush1.msra.mxu0 %v556
    %1409 = vmatprep.subr.mxu0 0.0
    %1410 = vmatpush1.msra.mxu0 %v907
    %1411 = vmatprep.subr.mxu0 0.0
    %1412 = vmatpush1.msra.mxu0 0.0
    %1413 = vmatprep.subr.mxu0 0.0
    %1414 = vmatpush1.msra.mxu0 0.0
    %1415 = vmatprep.subr.mxu0 0.0
    %1416 = vmatpush1.msra.mxu0 0.0
    %1417 = vmatprep.subr.mxu0 0.0
    %1418 = vmatpush1.msra.mxu0 0.0
    %1419 = vmatprep.subr.mxu0 0.0
    %1420 = vmatpush1.msra.mxu0 0.0
    %1421 = vmatprep.subr.mxu0 0.0
    %1422 = vmatpush1.msra.mxu0 0.0
    %1423 = vmatprep.subr.mxu0 0.0
    %1424 = vmatpush1.msra.mxu0 0.0
    %1425 = vmatprep.subr.mxu0 0.0
    %1426 = vmatpush1.msra.mxu0 0.0
    %1427 = vmatprep.subr.mxu0 0.0
    %1428 = vmatpush1.msra.mxu0 0.0
    %1429 = vmatprep.subr.mxu0 0.0
    %1430 = vmatpush1.msra.mxu0 0.0
    %1431 = vmatprep.subr.mxu0 0.0
    %1432 = vmatpush1.msra.mxu0 0.0
    %1433 = vmatprep.subr.mxu0 0.0
    %1434 = vmatpush1.msra.mxu0 0.0
    %1435 = vmatprep.subr.mxu0 0.0
    %1436 = vmatpush1.msra.mxu0 0.0
    %1437 = vmatprep.subr.mxu0 0.0
    %1438 = vmatpush1.msra.mxu0 0.0
    %1439 = vmatprep.subr.mxu0 0.0
    %1440 = vmatpush1.msra.mxu0 0.0
    %1441 = vmatprep.subr.mxu0 0.0
    %1442 = vmatpush1.msra.mxu0 0.0
    %1443 = vmatprep.subr.mxu0 0.0
    %1444 = vmatpush1.msra.mxu0 0.0
    %1445 = vmatprep.subr.mxu0 0.0
    %1446 = vmatpush1.msra.mxu0 0.0
    %1447 = vmatprep.subr.mxu0 0.0
    %1448 = vmatpush1.msra.mxu0 0.0
    %1449 = vmatprep.subr.mxu0 0.0
    %1450 = vmatpush1.msra.mxu0 0.0
    %1451 = vmatprep.subr.mxu0 0.0
    %1452 = vmatpush1.msra.mxu0 0.0
    %1453 = vmatprep.subr.mxu0 0.0
    %1454 = vmatpush1.msra.mxu0 0.0
    %1455 = vmatprep.subr.mxu0 0.0
    %1456 = vmatpush1.msra.mxu0 0.0
    %1457 = vmatprep.subr.mxu0 0.0
    %1458 = vmatpush1.msra.mxu0 0.0
    %1459 = vmatprep.subr.mxu0 0.0
    %1460 = vmatpush1.msra.mxu0 0.0
    %1461 = vmatprep.mubr.f32.mxu0 0.0
    %1462 = vmatmul.mubr.f32.gmra.mrb[0].mxu0 %v95
    %v1463 = vpop.f32.mrb[0].mxu0
    %v1464 = vadd.f32 0.0, %v1463
    %v1465 = vpop.f32.mrb[0].mxu0
    %1466 = vmatprep.mubr.f32.mxu0 0.0
    %1467 = vmatmul.mubr.f32.gmra.mrb[0].mxu0 %v98
    %v1468 = vpop.f32.mrb[0].mxu0
    %v1469 = vadd.f32 0.0, %v1468
    %v1470 = vpop.f32.mrb[0].mxu0
    %1471 = vdwg.mxu0
    %1472 = vmatprep.subr.mxu0 0.0
    %1473 = vmatpush1.msra.mxu0 %v558
    %1474 = vmatprep.subr.mxu0 0.0
    %1475 = vmatpush1.msra.mxu0 0.0
    %1476 = vmatprep.subr.mxu0 0.0
    %1477 = vmatpush1.msra.mxu0 0.0
    %1478 = vmatprep.subr.mxu0 0.0
    %1479 = vmatpush1.msra.mxu0 0.0
    %1480 = vmatprep.subr.mxu0 0.0
    %1481 = vmatpush1.msra.mxu0 0.0
    %1482 = vmatprep.subr.mxu0 0.0
    %1483 = vmatpush1.msra.mxu0 0.0
    %1484 = vmatprep.subr.mxu0 0.0
    %1485 = vmatpush1.msra.mxu0 0.0
    %1486 = vmatprep.subr.mxu0 0.0
    %1487 = vmatpush1.msra.mxu0 0.0
    %1488 = vmatprep.subr.mxu0 0.0
    %1489 = vmatpush1.msra.mxu0 0.0
    %1490 = vmatprep.subr.mxu0 0.0
    %1491 = vmatpush1.msra.mxu0 0.0
    %1492 = vmatprep.subr.mxu0 0.0
    %1493 = vmatpush1.msra.mxu0 0.0
    %1494 = vmatprep.subr.mxu0 0.0
    %1495 = vmatpush1.msra.mxu0 0.0
    %1496 = vmatprep.subr.mxu0 0.0
    %1497 = vmatpush1.msra.mxu0 0.0
    %1498 = vmatprep.subr.mxu0 0.0
    %1499 = vmatpush1.msra.mxu0 0.0
    %1500 = vmatprep.subr.mxu0 0.0
    %1501 = vmatpush1.msra.mxu0 0.0
    %1502 = vmatprep.subr.mxu0 0.0
    %1503 = vmatpush1.msra.mxu0 0.0
    %1504 = vmatprep.subr.mxu0 0.0
    %1505 = vmatpush1.msra.mxu0 0.0
    %1506 = vmatprep.subr.mxu0 0.0
    %1507 = vmatpush1.msra.mxu0 0.0
    %1508 = vmatprep.subr.mxu0 0.0
    %1509 = vmatpush1.msra.mxu0 0.0
    %1510 = vmatprep.subr.mxu0 0.0
    %1511 = vmatpush1.msra.mxu0 0.0
    %1512 = vmatprep.subr.mxu0 0.0
    %1513 = vmatpush1.msra.mxu0 0.0
    %1514 = vmatprep.subr.mxu0 0.0
    %1515 = vmatpush1.msra.mxu0 0.0
    %1516 = vmatprep.subr.mxu0 0.0
    %1517 = vmatpush1.msra.mxu0 0.0
    %1518 = vmatprep.subr.mxu0 0.0
    %1519 = vmatpush1.msra.mxu0 0.0
    %1520 = vmatprep.subr.mxu0 0.0
    %1521 = vmatpush1.msra.mxu0 0.0
    %1522 = vmatprep.subr.mxu0 0.0
    %1523 = vmatpush1.msra.mxu0 0.0
    %1524 = vmatprep.subr.mxu0 0.0
    %1525 = vmatpush1.msra.mxu0 0.0
    %1526 = vmatprep.subr.mxu0 0.0
    %1527 = vmatpush1.msra.mxu0 0.0
    %1528 = vmatprep.subr.mxu0 0.0
    %1529 = vmatpush1.msra.mxu0 0.0
    %1530 = vmatprep.subr.mxu0 0.0
    %1531 = vmatpush1.msra.mxu0 0.0
    %1532 = vmatprep.subr.mxu0 0.0
    %1533 = vmatpush1.msra.mxu0 0.0
    %1534 = vmatprep.subr.mxu0 0.0
    %1535 = vmatpush1.msra.mxu0 0.0
    %1536 = vmatprep.mubr.f32.mxu0 0.0
    %1537 = vmatmul.mubr.f32.gmra.mrb[0].mxu0 %v1222
    %v1538 = vpop.f32.mrb[0].mxu0
    %v1539 = vadd.f32 0.0, %v1538
    %v1540 = vpop.f32.mrb[0].mxu0
    %1541 = vmatprep.mubr.f32.mxu0 0.0
    %1542 = vmatmul.mubr.f32.gmra.mrb[0].mxu0 %v1225
    %v1543 = vpop.f32.mrb[0].mxu0
    %v1544 = vadd.f32 0.0, %v1543
    %v1545 = vpop.f32.mrb[0].mxu0
    %1546 = vdwg.mxu0
    %v1547 = vmul.f32 %v1464, %v1539
    %v1548 = vmul.f32 %v1469, %v1544
    %v1549 = vadd.f32 %v1061, %v1547
    %v1550 = vadd.f32 %v1062, %v1548
    %v1551 = vmul.f32 %v1464, %v1464
    %v1552 = vmul.f32 %v1469, %v1469
    %v1553 = vadd.f32 %v1065, %v1551
    %v1554 = vadd.f32 %v1066, %v1552
    %1555 = vmatprep.subr.mxu0 %v520
    %1556 = vmatpush1.msra.mxu0 %v519
    %1557 = vmatprep.subr.mxu0 %v524
    %1558 = vmatpush1.msra.mxu0 %v523
    %1559 = vmatprep.subr.mxu0 %v528
    %1560 = vmatpush1.msra.mxu0 %v527
    %1561 = vmatprep.subr.mxu0 %v532
    %1562 = vmatpush1.msra.mxu0 %v531
    %1563 = vmatprep.subr.mxu0 %v536
    %1564 = vmatpush1.msra.mxu0 %v535
    %1565 = vmatprep.subr.mxu0 %v540
    %1566 = vmatpush1.msra.mxu0 %v539
    %1567 = vmatprep.subr.mxu0 %v567
    %1568 = vmatpush1.msra.mxu0 %v564
    %1569 = vmatprep.subr.mxu0 0.0
    %1570 = vmatpush1.msra.mxu0 0.0
    %1571 = vmatprep.subr.mxu0 0.0
    %1572 = vmatpush1.msra.mxu0 0.0
    %1573 = vmatprep.subr.mxu0 0.0
    %1574 = vmatpush1.msra.mxu0 0.0
    %1575 = vmatprep.subr.mxu0 0.0
    %1576 = vmatpush1.msra.mxu0 0.0
    %1577 = vmatprep.subr.mxu0 0.0
    %1578 = vmatpush1.msra.mxu0 0.0
    %1579 = vmatprep.subr.mxu0 0.0
    %1580 = vmatpush1.msra.mxu0 0.0
    %1581 = vmatprep.subr.mxu0 0.0
    %1582 = vmatpush1.msra.mxu0 0.0
    %1583 = vmatprep.subr.mxu0 0.0
    %1584 = vmatpush1.msra.mxu0 0.0
    %1585 = vmatprep.subr.mxu0 0.0
    %1586 = vmatpush1.msra.mxu0 0.0
    %1587 = vmatprep.subr.mxu0 0.0
    %1588 = vmatpush1.msra.mxu0 0.0
    %1589 = vmatprep.subr.mxu0 0.0
    %1590 = vmatpush1.msra.mxu0 0.0
    %1591 = vmatprep.subr.mxu0 0.0
    %1592 = vmatpush1.msra.mxu0 0.0
    %1593 = vmatprep.subr.mxu0 0.0
    %1594 = vmatpush1.msra.mxu0 0.0
    %1595 = vmatprep.subr.mxu0 0.0
    %1596 = vmatpush1.msra.mxu0 0.0
    %1597 = vmatprep.subr.mxu0 0.0
    %1598 = vmatpush1.msra.mxu0 0.0
    %1599 = vmatprep.subr.mxu0 0.0
    %1600 = vmatpush1.msra.mxu0 0.0
    %1601 = vmatprep.subr.mxu0 0.0
    %1602 = vmatpush1.msra.mxu0 0.0
    %1603 = vmatprep.subr.mxu0 0.0
    %1604 = vmatpush1.msra.mxu0 0.0
    %1605 = vmatprep.subr.mxu0 0.0
    %1606 = vmatpush1.msra.mxu0 0.0
    %1607 = vmatprep.subr.mxu0 0.0
    %1608 = vmatpush1.msra.mxu0 0.0
    %1609 = vmatprep.subr.mxu0 0.0
    %1610 = vmatpush1.msra.mxu0 0.0
    %1611 = vmatprep.subr.mxu0 0.0
    %1612 = vmatpush1.msra.mxu0 0.0
    %1613 = vmatprep.subr.mxu0 0.0
    %1614 = vmatpush1.msra.mxu0 0.0
    %1615 = vmatprep.subr.mxu0 0.0
    %1616 = vmatpush1.msra.mxu0 0.0
    %1617 = vmatprep.subr.mxu0 0.0
    %1618 = vmatpush1.msra.mxu0 0.0
    %1619 = vmatprep.mubr.f32.mxu0 0.0
    %1620 = vmatmul.mubr.f32.gmra.mrb[0].mxu0 %v421
    %v1621 = vpop.f32.mrb[0].mxu0
    %v1622 = vadd.f32 0.0, %v1621
    %v1623 = vpop.f32.mrb[0].mxu0
    %v1624 = vadd.f32 0.0, %v1623
    %1625 = vmatprep.mubr.f32.mxu0 0.0
    %1626 = vmatmul.mubr.f32.gmra.mrb[0].mxu0 %v424
    %v1627 = vpop.f32.mrb[0].mxu0
    %v1628 = vadd.f32 0.0, %v1627
    %v1629 = vpop.f32.mrb[0].mxu0
    %v1630 = vadd.f32 0.0, %v1629
    %1631 = vdwg.mxu0
    %1632 = vmatprep.subr.mxu0 %v522
    %1633 = vmatpush1.msra.mxu0 %v521
    %1634 = vmatprep.subr.mxu0 %v526
    %1635 = vmatpush1.msra.mxu0 %v525
    %1636 = vmatprep.subr.mxu0 %v530
    %1637 = vmatpush1.msra.mxu0 %v529
    %1638 = vmatprep.subr.mxu0 %v534
    %1639 = vmatpush1.msra.mxu0 %v533
    %1640 = vmatprep.subr.mxu0 %v538
    %1641 = vmatpush1.msra.mxu0 %v537
    %1642 = vmatprep.subr.mxu0 %v542
    %1643 = vmatpush1.msra.mxu0 %v541
    %1644 = vmatprep.subr.mxu0 %v573
    %1645 = vmatpush1.msra.mxu0 %v570
    %1646 = vmatprep.subr.mxu0 0.0
    %1647 = vmatpush1.msra.mxu0 0.0
    %1648 = vmatprep.subr.mxu0 0.0
    %1649 = vmatpush1.msra.mxu0 0.0
    %1650 = vmatprep.subr.mxu0 0.0
    %1651 = vmatpush1.msra.mxu0 0.0
    %1652 = vmatprep.subr.mxu0 0.0
    %1653 = vmatpush1.msra.mxu0 0.0
    %1654 = vmatprep.subr.mxu0 0.0
    %1655 = vmatpush1.msra.mxu0 0.0
    %1656 = vmatprep.subr.mxu0 0.0
    %1657 = vmatpush1.msra.mxu0 0.0
    %1658 = vmatprep.subr.mxu0 0.0
    %1659 = vmatpush1.msra.mxu0 0.0
    %1660 = vmatprep.subr.mxu0 0.0
    %1661 = vmatpush1.msra.mxu0 0.0
    %1662 = vmatprep.subr.mxu0 0.0
    %1663 = vmatpush1.msra.mxu0 0.0
    %1664 = vmatprep.subr.mxu0 0.0
    %1665 = vmatpush1.msra.mxu0 0.0
    %1666 = vmatprep.subr.mxu0 0.0
    %1667 = vmatpush1.msra.mxu0 0.0
    %1668 = vmatprep.subr.mxu0 0.0
    %1669 = vmatpush1.msra.mxu0 0.0
    %1670 = vmatprep.subr.mxu0 0.0
    %1671 = vmatpush1.msra.mxu0 0.0
    %1672 = vmatprep.subr.mxu0 0.0
    %1673 = vmatpush1.msra.mxu0 0.0
    %1674 = vmatprep.subr.mxu0 0.0
    %1675 = vmatpush1.msra.mxu0 0.0
    %1676 = vmatprep.subr.mxu0 0.0
    %1677 = vmatpush1.msra.mxu0 0.0
    %1678 = vmatprep.subr.mxu0 0.0
    %1679 = vmatpush1.msra.mxu0 0.0
    %1680 = vmatprep.subr.mxu0 0.0
    %1681 = vmatpush1.msra.mxu0 0.0
    %1682 = vmatprep.subr.mxu0 0.0
    %1683 = vmatpush1.msra.mxu0 0.0
    %1684 = vmatprep.subr.mxu0 0.0
    %1685 = vmatpush1.msra.mxu0 0.0
    %1686 = vmatprep.subr.mxu0 0.0
    %1687 = vmatpush1.msra.mxu0 0.0
    %1688 = vmatprep.subr.mxu0 0.0
    %1689 = vmatpush1.msra.mxu0 0.0
    %1690 = vmatprep.subr.mxu0 0.0
    %1691 = vmatpush1.msra.mxu0 0.0
    %1692 = vmatprep.subr.mxu0 0.0
    %1693 = vmatpush1.msra.mxu0 0.0
    %1694 = vmatprep.subr.mxu0 0.0
    %1695 = vmatpush1.msra.mxu0 0.0
    %1696 = vmatprep.mubr.f32.mxu0 0.0
    %1697 = vmatmul.mubr.f32.gmra.mrb[0].mxu0 %v421
    %v1698 = vpop.f32.mrb[0].mxu0
    %v1699 = vadd.f32 0.0, %v1698
    %v1700 = vpop.f32.mrb[0].mxu0
    %v1701 = vadd.f32 0.0, %v1700
    %1702 = vmatprep.mubr.f32.mxu0 0.0
    %1703 = vmatmul.mubr.f32.gmra.mrb[0].mxu0 %v424
    %v1704 = vpop.f32.mrb[0].mxu0
    %v1705 = vadd.f32 0.0, %v1704
    %v1706 = vpop.f32.mrb[0].mxu0
    %v1707 = vadd.f32 0.0, %v1706
    %1708 = vdwg.mxu0
    %v1710 = vsel %vm729, %v517, 0
    %v1713 = vsel %vm729, %v518, 0
    %1715 = vmatprep.subr.mxu0 %v548
    %1716 = vmatpush1.msra.mxu0 %v547
    %1717 = vmatprep.subr.mxu0 0.0
    %1718 = vmatpush1.msra.mxu0 0.0
    %1719 = vmatprep.subr.mxu0 0.0
    %1720 = vmatpush1.msra.mxu0 0.0
    %1721 = vmatprep.subr.mxu0 0.0
    %1722 = vmatpush1.msra.mxu0 0.0
    %1723 = vmatprep.subr.mxu0 0.0
    %1724 = vmatpush1.msra.mxu0 0.0
    %1725 = vmatprep.subr.mxu0 0.0
    %1726 = vmatpush1.msra.mxu0 0.0
    %1727 = vmatprep.subr.mxu0 0.0
    %1728 = vmatpush1.msra.mxu0 0.0
    %1729 = vmatprep.subr.mxu0 0.0
    %1730 = vmatpush1.msra.mxu0 0.0
    %1731 = vmatprep.subr.mxu0 0.0
    %1732 = vmatpush1.msra.mxu0 0.0
    %1733 = vmatprep.subr.mxu0 0.0
    %1734 = vmatpush1.msra.mxu0 0.0
    %1735 = vmatprep.subr.mxu0 0.0
    %1736 = vmatpush1.msra.mxu0 0.0
    %1737 = vmatprep.subr.mxu0 0.0
    %1738 = vmatpush1.msra.mxu0 0.0
    %1739 = vmatprep.subr.mxu0 0.0
    %1740 = vmatpush1.msra.mxu0 0.0
    %1741 = vmatprep.subr.mxu0 0.0
    %1742 = vmatpush1.msra.mxu0 0.0
    %1743 = vmatprep.subr.mxu0 0.0
    %1744 = vmatpush1.msra.mxu0 0.0
    %1745 = vmatprep.subr.mxu0 0.0
    %1746 = vmatpush1.msra.mxu0 0.0
    %1747 = vmatprep.subr.mxu0 0.0
    %1748 = vmatpush1.msra.mxu0 0.0
    %1749 = vmatprep.subr.mxu0 0.0
    %1750 = vmatpush1.msra.mxu0 0.0
    %1751 = vmatprep.subr.mxu0 0.0
    %1752 = vmatpush1.msra.mxu0 0.0
    %1753 = vmatprep.subr.mxu0 0.0
    %1754 = vmatpush1.msra.mxu0 0.0
    %1755 = vmatprep.subr.mxu0 0.0
    %1756 = vmatpush1.msra.mxu0 0.0
    %1757 = vmatprep.subr.mxu0 0.0
    %1758 = vmatpush1.msra.mxu0 0.0
    %1759 = vmatprep.subr.mxu0 0.0
    %1760 = vmatpush1.msra.mxu0 0.0
    %1761 = vmatprep.subr.mxu0 0.0
    %1762 = vmatpush1.msra.mxu0 0.0
    %1763 = vmatprep.subr.mxu0 0.0
    %1764 = vmatpush1.msra.mxu0 0.0
    %1765 = vmatprep.subr.mxu0 0.0
    %1766 = vmatpush1.msra.mxu0 0.0
    %1767 = vmatprep.subr.mxu0 0.0
    %1768 = vmatpush1.msra.mxu0 0.0
    %1769 = vmatprep.subr.mxu0 0.0
    %1770 = vmatpush1.msra.mxu0 0.0
    %1771 = vmatprep.subr.mxu0 0.0
    %1772 = vmatpush1.msra.mxu0 0.0
    %1773 = vmatprep.subr.mxu0 0.0
    %1774 = vmatpush1.msra.mxu0 0.0
    %1775 = vmatprep.subr.mxu0 0.0
    %1776 = vmatpush1.msra.mxu0 0.0
    %1777 = vmatprep.subr.mxu0 0.0
    %1778 = vmatpush1.msra.mxu0 0.0
    %1779 = vmatprep.mubr.f32.mxu0 0.0
    %1780 = vmatmul.mubr.f32.gmra.mrb[0].mxu0 %v1710
    %v1781 = vpop.f32.mrb[0].mxu0
    %v1782 = vadd.f32 0.0, %v1781
    %v1783 = vpop.f32.mrb[0].mxu0
    %v1784 = vadd.f32 0.0, %v1783
    %1785 = vmatprep.mubr.f32.mxu0 0.0
    %1786 = vmatmul.mubr.f32.gmra.mrb[0].mxu0 %v1713
    %v1787 = vpop.f32.mrb[0].mxu0
    %v1788 = vadd.f32 0.0, %v1787
    %v1789 = vpop.f32.mrb[0].mxu0
    %v1790 = vadd.f32 0.0, %v1789
    %1791 = vdwg.mxu0
    %1792 = vmatprep.subr.mxu0 %v550
    %1793 = vmatpush1.msra.mxu0 %v549
    %1794 = vmatprep.subr.mxu0 0.0
    %1795 = vmatpush1.msra.mxu0 0.0
    %1796 = vmatprep.subr.mxu0 0.0
    %1797 = vmatpush1.msra.mxu0 0.0
    %1798 = vmatprep.subr.mxu0 0.0
    %1799 = vmatpush1.msra.mxu0 0.0
    %1800 = vmatprep.subr.mxu0 0.0
    %1801 = vmatpush1.msra.mxu0 0.0
    %1802 = vmatprep.subr.mxu0 0.0
    %1803 = vmatpush1.msra.mxu0 0.0
    %1804 = vmatprep.subr.mxu0 0.0
    %1805 = vmatpush1.msra.mxu0 0.0
    %1806 = vmatprep.subr.mxu0 0.0
    %1807 = vmatpush1.msra.mxu0 0.0
    %1808 = vmatprep.subr.mxu0 0.0
    %1809 = vmatpush1.msra.mxu0 0.0
    %1810 = vmatprep.subr.mxu0 0.0
    %1811 = vmatpush1.msra.mxu0 0.0
    %1812 = vmatprep.subr.mxu0 0.0
    %1813 = vmatpush1.msra.mxu0 0.0
    %1814 = vmatprep.subr.mxu0 0.0
    %1815 = vmatpush1.msra.mxu0 0.0
    %1816 = vmatprep.subr.mxu0 0.0
    %1817 = vmatpush1.msra.mxu0 0.0
    %1818 = vmatprep.subr.mxu0 0.0
    %1819 = vmatpush1.msra.mxu0 0.0
    %1820 = vmatprep.subr.mxu0 0.0
    %1821 = vmatpush1.msra.mxu0 0.0
    %1822 = vmatprep.subr.mxu0 0.0
    %1823 = vmatpush1.msra.mxu0 0.0
    %1824 = vmatprep.subr.mxu0 0.0
    %1825 = vmatpush1.msra.mxu0 0.0
    %1826 = vmatprep.subr.mxu0 0.0
    %1827 = vmatpush1.msra.mxu0 0.0
    %1828 = vmatprep.subr.mxu0 0.0
    %1829 = vmatpush1.msra.mxu0 0.0
    %1830 = vmatprep.subr.mxu0 0.0
    %1831 = vmatpush1.msra.mxu0 0.0
    %1832 = vmatprep.subr.mxu0 0.0
    %1833 = vmatpush1.msra.mxu0 0.0
    %1834 = vmatprep.subr.mxu0 0.0
    %1835 = vmatpush1.msra.mxu0 0.0
    %1836 = vmatprep.subr.mxu0 0.0
    %1837 = vmatpush1.msra.mxu0 0.0
    %1838 = vmatprep.subr.mxu0 0.0
    %1839 = vmatpush1.msra.mxu0 0.0
    %1840 = vmatprep.subr.mxu0 0.0
    %1841 = vmatpush1.msra.mxu0 0.0
    %1842 = vmatprep.subr.mxu0 0.0
    %1843 = vmatpush1.msra.mxu0 0.0
    %1844 = vmatprep.subr.mxu0 0.0
    %1845 = vmatpush1.msra.mxu0 0.0
    %1846 = vmatprep.subr.mxu0 0.0
    %1847 = vmatpush1.msra.mxu0 0.0
    %1848 = vmatprep.subr.mxu0 0.0
    %1849 = vmatpush1.msra.mxu0 0.0
    %1850 = vmatprep.subr.mxu0 0.0
    %1851 = vmatpush1.msra.mxu0 0.0
    %1852 = vmatprep.subr.mxu0 0.0
    %1853 = vmatpush1.msra.mxu0 0.0
    %1854 = vmatprep.subr.mxu0 0.0
    %1855 = vmatpush1.msra.mxu0 0.0
    %1856 = vmatprep.mubr.f32.mxu0 0.0
    %1857 = vmatmul.mubr.f32.gmra.mrb[0].mxu0 %v1710
    %v1858 = vpop.f32.mrb[0].mxu0
    %v1859 = vadd.f32 0.0, %v1858
    %v1860 = vpop.f32.mrb[0].mxu0
    %v1861 = vadd.f32 0.0, %v1860
    %1862 = vmatprep.mubr.f32.mxu0 0.0
    %1863 = vmatmul.mubr.f32.gmra.mrb[0].mxu0 %v1713
    %v1864 = vpop.f32.mrb[0].mxu0
    %v1865 = vadd.f32 0.0, %v1864
    %v1866 = vpop.f32.mrb[0].mxu0
    %v1867 = vadd.f32 0.0, %v1866
    %1868 = vdwg.mxu0
    %v1869 = vmul.f32 %v1622, %v1782
    %v1870 = vmul.f32 %v1624, %v1784
    %v1871 = vmul.f32 %v1699, %v1859
    %v1872 = vmul.f32 %v1701, %v1861
    %v1873 = vmul.f32 %v1628, %v1788
    %v1874 = vmul.f32 %v1630, %v1790
    %v1875 = vmul.f32 %v1705, %v1865
    %v1876 = vmul.f32 %v1707, %v1867
    %v1877 = vadd.f32 %v1389, %v1869
    %v1878 = vadd.f32 %v1390, %v1870
    %v1879 = vadd.f32 %v1391, %v1871
    %v1880 = vadd.f32 %v1392, %v1872
    %v1881 = vadd.f32 %v1393, %v1873
    %v1882 = vadd.f32 %v1394, %v1874
    %v1883 = vadd.f32 %v1395, %v1875
    %v1884 = vadd.f32 %v1396, %v1876
    %1885 = vmatprep.subr.mxu0 0.0
    %1886 = vmatpush1.msra.mxu0 %v551
    %1887 = vmatprep.subr.mxu0 0.0
    %1888 = vmatpush1.msra.mxu0 %v552
    %1889 = vmatprep.subr.mxu0 0.0
    %1890 = vmatpush1.msra.mxu0 %v553
    %1891 = vmatprep.subr.mxu0 0.0
    %1892 = vmatpush1.msra.mxu0 %v554
    %1893 = vmatprep.subr.mxu0 0.0
    %1894 = vmatpush1.msra.mxu0 %v555
    %1895 = vmatprep.subr.mxu0 0.0
    %1896 = vmatpush1.msra.mxu0 %v556
    %1897 = vmatprep.subr.mxu0 0.0
    %1898 = vmatpush1.msra.mxu0 %v907
    %1899 = vmatprep.subr.mxu0 0.0
    %1900 = vmatpush1.msra.mxu0 0.0
    %1901 = vmatprep.subr.mxu0 0.0
    %1902 = vmatpush1.msra.mxu0 0.0
    %1903 = vmatprep.subr.mxu0 0.0
    %1904 = vmatpush1.msra.mxu0 0.0
    %1905 = vmatprep.subr.mxu0 0.0
    %1906 = vmatpush1.msra.mxu0 0.0
    %1907 = vmatprep.subr.mxu0 0.0
    %1908 = vmatpush1.msra.mxu0 0.0
    %1909 = vmatprep.subr.mxu0 0.0
    %1910 = vmatpush1.msra.mxu0 0.0
    %1911 = vmatprep.subr.mxu0 0.0
    %1912 = vmatpush1.msra.mxu0 0.0
    %1913 = vmatprep.subr.mxu0 0.0
    %1914 = vmatpush1.msra.mxu0 0.0
    %1915 = vmatprep.subr.mxu0 0.0
    %1916 = vmatpush1.msra.mxu0 0.0
    %1917 = vmatprep.subr.mxu0 0.0
    %1918 = vmatpush1.msra.mxu0 0.0
    %1919 = vmatprep.subr.mxu0 0.0
    %1920 = vmatpush1.msra.mxu0 0.0
    %1921 = vmatprep.subr.mxu0 0.0
    %1922 = vmatpush1.msra.mxu0 0.0
    %1923 = vmatprep.subr.mxu0 0.0
    %1924 = vmatpush1.msra.mxu0 0.0
    %1925 = vmatprep.subr.mxu0 0.0
    %1926 = vmatpush1.msra.mxu0 0.0
    %1927 = vmatprep.subr.mxu0 0.0
    %1928 = vmatpush1.msra.mxu0 0.0
    %1929 = vmatprep.subr.mxu0 0.0
    %1930 = vmatpush1.msra.mxu0 0.0
    %1931 = vmatprep.subr.mxu0 0.0
    %1932 = vmatpush1.msra.mxu0 0.0
    %1933 = vmatprep.subr.mxu0 0.0
    %1934 = vmatpush1.msra.mxu0 0.0
    %1935 = vmatprep.subr.mxu0 0.0
    %1936 = vmatpush1.msra.mxu0 0.0
    %1937 = vmatprep.subr.mxu0 0.0
    %1938 = vmatpush1.msra.mxu0 0.0
    %1939 = vmatprep.subr.mxu0 0.0
    %1940 = vmatpush1.msra.mxu0 0.0
    %1941 = vmatprep.subr.mxu0 0.0
    %1942 = vmatpush1.msra.mxu0 0.0
    %1943 = vmatprep.subr.mxu0 0.0
    %1944 = vmatpush1.msra.mxu0 0.0
    %1945 = vmatprep.subr.mxu0 0.0
    %1946 = vmatpush1.msra.mxu0 0.0
    %1947 = vmatprep.subr.mxu0 0.0
    %1948 = vmatpush1.msra.mxu0 0.0
    %1949 = vmatprep.mubr.f32.mxu0 0.0
    %1950 = vmatmul.mubr.f32.gmra.mrb[0].mxu0 %v421
    %v1951 = vpop.f32.mrb[0].mxu0
    %v1952 = vadd.f32 0.0, %v1951
    %v1953 = vpop.f32.mrb[0].mxu0
    %1954 = vmatprep.mubr.f32.mxu0 0.0
    %1955 = vmatmul.mubr.f32.gmra.mrb[0].mxu0 %v424
    %v1956 = vpop.f32.mrb[0].mxu0
    %v1957 = vadd.f32 0.0, %v1956
    %v1958 = vpop.f32.mrb[0].mxu0
    %1959 = vdwg.mxu0
    %1960 = vmatprep.subr.mxu0 0.0
    %1961 = vmatpush1.msra.mxu0 %v558
    %1962 = vmatprep.subr.mxu0 0.0
    %1963 = vmatpush1.msra.mxu0 0.0
    %1964 = vmatprep.subr.mxu0 0.0
    %1965 = vmatpush1.msra.mxu0 0.0
    %1966 = vmatprep.subr.mxu0 0.0
    %1967 = vmatpush1.msra.mxu0 0.0
    %1968 = vmatprep.subr.mxu0 0.0
    %1969 = vmatpush1.msra.mxu0 0.0
    %1970 = vmatprep.subr.mxu0 0.0
    %1971 = vmatpush1.msra.mxu0 0.0
    %1972 = vmatprep.subr.mxu0 0.0
    %1973 = vmatpush1.msra.mxu0 0.0
    %1974 = vmatprep.subr.mxu0 0.0
    %1975 = vmatpush1.msra.mxu0 0.0
    %1976 = vmatprep.subr.mxu0 0.0
    %1977 = vmatpush1.msra.mxu0 0.0
    %1978 = vmatprep.subr.mxu0 0.0
    %1979 = vmatpush1.msra.mxu0 0.0
    %1980 = vmatprep.subr.mxu0 0.0
    %1981 = vmatpush1.msra.mxu0 0.0
    %1982 = vmatprep.subr.mxu0 0.0
    %1983 = vmatpush1.msra.mxu0 0.0
    %1984 = vmatprep.subr.mxu0 0.0
    %1985 = vmatpush1.msra.mxu0 0.0
    %1986 = vmatprep.subr.mxu0 0.0
    %1987 = vmatpush1.msra.mxu0 0.0
    %1988 = vmatprep.subr.mxu0 0.0
    %1989 = vmatpush1.msra.mxu0 0.0
    %1990 = vmatprep.subr.mxu0 0.0
    %1991 = vmatpush1.msra.mxu0 0.0
    %1992 = vmatprep.subr.mxu0 0.0
    %1993 = vmatpush1.msra.mxu0 0.0
    %1994 = vmatprep.subr.mxu0 0.0
    %1995 = vmatpush1.msra.mxu0 0.0
    %1996 = vmatprep.subr.mxu0 0.0
    %1997 = vmatpush1.msra.mxu0 0.0
    %1998 = vmatprep.subr.mxu0 0.0
    %1999 = vmatpush1.msra.mxu0 0.0
    %2000 = vmatprep.subr.mxu0 0.0
    %2001 = vmatpush1.msra.mxu0 0.0
    %2002 = vmatprep.subr.mxu0 0.0
    %2003 = vmatpush1.msra.mxu0 0.0
    %2004 = vmatprep.subr.mxu0 0.0
    %2005 = vmatpush1.msra.mxu0 0.0
    %2006 = vmatprep.subr.mxu0 0.0
    %2007 = vmatpush1.msra.mxu0 0.0
    %2008 = vmatprep.subr.mxu0 0.0
    %2009 = vmatpush1.msra.mxu0 0.0
    %2010 = vmatprep.subr.mxu0 0.0
    %2011 = vmatpush1.msra.mxu0 0.0
    %2012 = vmatprep.subr.mxu0 0.0
    %2013 = vmatpush1.msra.mxu0 0.0
    %2014 = vmatprep.subr.mxu0 0.0
    %2015 = vmatpush1.msra.mxu0 0.0
    %2016 = vmatprep.subr.mxu0 0.0
    %2017 = vmatpush1.msra.mxu0 0.0
    %2018 = vmatprep.subr.mxu0 0.0
    %2019 = vmatpush1.msra.mxu0 0.0
    %2020 = vmatprep.subr.mxu0 0.0
    %2021 = vmatpush1.msra.mxu0 0.0
    %2022 = vmatprep.subr.mxu0 0.0
    %2023 = vmatpush1.msra.mxu0 0.0
    %2024 = vmatprep.mubr.f32.mxu0 0.0
    %2025 = vmatmul.mubr.f32.gmra.mrb[0].mxu0 %v1710
    %v2026 = vpop.f32.mrb[0].mxu0
    %v2027 = vadd.f32 0.0, %v2026
    %v2028 = vpop.f32.mrb[0].mxu0
    %2029 = vmatprep.mubr.f32.mxu0 0.0
    %2030 = vmatmul.mubr.f32.gmra.mrb[0].mxu0 %v1713
    %v2031 = vpop.f32.mrb[0].mxu0
    %v2032 = vadd.f32 0.0, %v2031
    %v2033 = vpop.f32.mrb[0].mxu0
    %2034 = vdwg.mxu0
    %v2035 = vmul.f32 %v1952, %v2027
    %v2036 = vmul.f32 %v1957, %v2032
    %v2037 = vadd.f32 %v1549, %v2035
    %v2038 = vadd.f32 %v1550, %v2036
    %v2039 = vmul.f32 %v1952, %v1952
    %v2040 = vmul.f32 %v1957, %v1957
    %v2041 = vadd.f32 %v1553, %v2039
    %v2042 = vadd.f32 %v1554, %v2040
    %v2043 = vrsqrt.pop %v2041
    %v2044 = vmul.f32 %v2041, %v2043
    %vm2045 = vcmp.eq.f32.partialorder %v2041, inf
    %v2046 = vsel %vm2045, %v2041, %v2044
    %vm2047 = vcmp.eq.f32.partialorder %v2041, 0.0
    %v2048 = vand.u32 %v2041, 2147483648
    %v2049 = vsel %vm2047, %v2048, %v2046
    %v2050 = vrsqrt.pop %v2042
    %v2051 = vmul.f32 %v2042, %v2050
    %vm2052 = vcmp.eq.f32.partialorder %v2042, inf
    %v2053 = vsel %vm2052, %v2042, %v2051
    %vm2054 = vcmp.eq.f32.partialorder %v2042, 0.0
    %v2055 = vand.u32 %v2042, 2147483648
    %v2056 = vsel %vm2054, %v2055, %v2053
    %v2057 = vadd.f32 %v2049, 1e-08
    %v2058 = vadd.f32 %v2056, 1e-08
    %v2059 = vrcp.pop %v2057
    %v2060 = vmul.f32 %v2037, %v2059
    %v2061 = vrcp.pop %v2058
    %v2062 = vmul.f32 %v2038, %v2061
    %v2063 = vmax.f32 %v2060, -1.0
    %v2064 = vmax.f32 %v2062, -1.0
    %v2065 = vmin.f32 %v2063, 1.0
    %v2066 = vmin.f32 %v2064, 1.0
    %v2067 = vand.u32 2147483647, %v2065
    %v2068 = vand.u32 2147483647, %v2066
    %v2069 = vmul.f32 %v2065, %v2065
    %v2070 = vmul.f32 %v2066, %v2066
    %v2071 = vmul.f32 %v2069, -0.008656363
    %v2072 = vmul.f32 %v2070, -0.008656363
    %v2073 = vadd.f32 %v2071, -0.042743422
    %v2074 = vadd.f32 %v2072, -0.042743422
    %v2075 = vmul.f32 %v2069, %v2073
    %v2076 = vmul.f32 %v2070, %v2074
    %v2077 = vadd.f32 %v2075, 0.16666587
    %v2078 = vadd.f32 %v2076, 0.16666587
    %v2079 = vmul.f32 %v2069, %v2077
    %v2080 = vmul.f32 %v2070, %v2078
    %v2081 = vmul.f32 %v2069, -0.70662963
    %v2082 = vmul.f32 %v2070, -0.70662963
    %v2083 = vadd.f32 %v2081, 1.0
    %v2084 = vadd.f32 %v2082, 1.0
    %v2085 = vrcp.pop %v2083
    %v2086 = vmul.f32 %v2079, %v2085
    %v2087 = vrcp.pop %v2084
    %v2088 = vmul.f32 %v2080, %v2087
    %v2089 = vmul.f32 %v2065, %v2086
    %v2090 = vmul.f32 %v2066, %v2088
    %v2091 = vadd.f32 %v2065, %v2089
    %v2092 = vadd.f32 %v2066, %v2090
    %v2093 = vsub.f32 1.5707964, %v2091
    %v2094 = vsub.f32 1.5707964, %v2092
    %v2095 = vsub.f32 1.0, %v2065
    %v2096 = vsub.f32 1.0, %v2066
    %v2097 = vmul.f32 %v2095, 0.5
    %v2098 = vmul.f32 %v2096, 0.5
    %v2099 = vrsqrt.pop %v2097
    %v2100 = vmul.f32 %v2097, %v2099
    %vm2101 = vcmp.eq.f32.partialorder %v2097, inf
    %v2102 = vsel %vm2101, %v2097, %v2100
    %vm2103 = vcmp.eq.f32.partialorder %v2097, 0.0
    %v2104 = vand.u32 %v2097, 2147483648
    %v2105 = vsel %vm2103, %v2104, %v2102
    %v2106 = vrsqrt.pop %v2098
    %v2107 = vmul.f32 %v2098, %v2106
    %vm2108 = vcmp.eq.f32.partialorder %v2098, inf
    %v2109 = vsel %vm2108, %v2098, %v2107
    %vm2110 = vcmp.eq.f32.partialorder %v2098, 0.0
    %v2111 = vand.u32 %v2098, 2147483648
    %v2112 = vsel %vm2110, %v2111, %v2109
    %v2113 = vmul.f32 %v2097, -0.008656363
    %v2114 = vmul.f32 %v2098, -0.008656363
    %v2115 = vadd.f32 %v2113, -0.042743422
    %v2116 = vadd.f32 %v2114, -0.042743422
    %v2117 = vmul.f32 %v2097, %v2115
    %v2118 = vmul.f32 %v2098, %v2116
    %v2119 = vadd.f32 %v2117, 0.16666587
    %v2120 = vadd.f32 %v2118, 0.16666587
    %v2121 = vmul.f32 %v2097, %v2119
    %v2122 = vmul.f32 %v2098, %v2120
    %v2123 = vmul.f32 %v2097, -0.70662963
    %v2124 = vmul.f32 %v2098, -0.70662963
    %v2125 = vadd.f32 %v2123, 1.0
    %v2126 = vadd.f32 %v2124, 1.0
    %v2127 = vrcp.pop %v2125
    %v2128 = vmul.f32 %v2121, %v2127
    %v2129 = vrcp.pop %v2126
    %v2130 = vmul.f32 %v2122, %v2129
    %v2131 = vmul.f32 %v2105, %v2128
    %v2132 = vmul.f32 %v2112, %v2130
    %v2133 = vadd.f32 %v2105, %v2131
    %v2134 = vadd.f32 %v2112, %v2132
    %v2135 = vmul.f32 %v2133, 2.0
    %v2136 = vmul.f32 %v2134, 2.0
    %v2137 = vadd.f32 %v2065, 1.0
    %v2138 = vadd.f32 %v2066, 1.0
    %v2139 = vmul.f32 %v2137, 0.5
    %v2140 = vmul.f32 %v2138, 0.5
    %v2141 = vrsqrt.pop %v2139
    %v2142 = vmul.f32 %v2139, %v2141
    %vm2143 = vcmp.eq.f32.partialorder %v2139, inf
    %v2144 = vsel %vm2143, %v2139, %v2142
    %vm2145 = vcmp.eq.f32.partialorder %v2139, 0.0
    %v2146 = vand.u32 %v2139, 2147483648
    %v2147 = vsel %vm2145, %v2146, %v2144
    %v2148 = vrsqrt.pop %v2140
    %v2149 = vmul.f32 %v2140, %v2148
    %vm2150 = vcmp.eq.f32.partialorder %v2140, inf
    %v2151 = vsel %vm2150, %v2140, %v2149
    %vm2152 = vcmp.eq.f32.partialorder %v2140, 0.0
    %v2153 = vand.u32 %v2140, 2147483648
    %v2154 = vsel %vm2152, %v2153, %v2151
    %v2155 = vmul.f32 %v2139, -0.008656363
    %v2156 = vmul.f32 %v2140, -0.008656363
    %v2157 = vadd.f32 %v2155, -0.042743422
    %v2158 = vadd.f32 %v2156, -0.042743422
    %v2159 = vmul.f32 %v2139, %v2157
    %v2160 = vmul.f32 %v2140, %v2158
    %v2161 = vadd.f32 %v2159, 0.16666587
    %v2162 = vadd.f32 %v2160, 0.16666587
    %v2163 = vmul.f32 %v2139, %v2161
    %v2164 = vmul.f32 %v2140, %v2162
    %v2165 = vmul.f32 %v2139, -0.70662963
    %v2166 = vmul.f32 %v2140, -0.70662963
    %v2167 = vadd.f32 %v2165, 1.0
    %v2168 = vadd.f32 %v2166, 1.0
    %v2169 = vrcp.pop %v2167
    %v2170 = vmul.f32 %v2163, %v2169
    %v2171 = vrcp.pop %v2168
    %v2172 = vmul.f32 %v2164, %v2171
    %v2173 = vmul.f32 %v2147, %v2170
    %v2174 = vmul.f32 %v2154, %v2172
    %v2175 = vadd.f32 %v2147, %v2173
    %v2176 = vadd.f32 %v2154, %v2174
    %v2177 = vmul.f32 %v2175, 2.0
    %v2178 = vmul.f32 %v2176, 2.0
    %v2179 = vsub.f32 3.1415927, %v2177
    %v2180 = vsub.f32 3.1415927, %v2178
    %vm2181 = vcmp.le.f32.partialorder %v2067, 0.5
    %vm2182 = vcmp.le.f32.partialorder %v2068, 0.5
    %vm2183 = vcmp.gt.f32.partialorder %v2065, 0.5
    %vm2184 = vcmp.gt.f32.partialorder %v2066, 0.5
    %v2185 = vsel %vm2183, %v2135, %v2179
    %v2186 = vsel %vm2184, %v2136, %v2180
    %v2187 = vsel %vm2181, %v2093, %v2185
    %v2188 = vsel %vm2182, %v2094, %v2186
    %v2190 = vsel %vm729, %v2187, 0
    %v2193 = vsel %vm729, %v2188, 0
    %2195 = vmatprep.subr.mxu0 %v560
    %2196 = vmatpush1.msra.mxu0 %v559
    %2197 = vmatprep.subr.mxu0 0.0
    %2198 = vmatpush1.msra.mxu0 0.0
    %2199 = vmatprep.subr.mxu0 0.0
    %2200 = vmatpush1.msra.mxu0 0.0
    %2201 = vmatprep.subr.mxu0 0.0
    %2202 = vmatpush1.msra.mxu0 0.0
    %2203 = vmatprep.subr.mxu0 0.0
    %2204 = vmatpush1.msra.mxu0 0.0
    %2205 = vmatprep.subr.mxu0 0.0
    %2206 = vmatpush1.msra.mxu0 0.0
    %2207 = vmatprep.subr.mxu0 0.0
    %2208 = vmatpush1.msra.mxu0 0.0
    %2209 = vmatprep.subr.mxu0 0.0
    %2210 = vmatpush1.msra.mxu0 0.0
    %2211 = vmatprep.subr.mxu0 0.0
    %2212 = vmatpush1.msra.mxu0 0.0
    %2213 = vmatprep.subr.mxu0 0.0
    %2214 = vmatpush1.msra.mxu0 0.0
    %2215 = vmatprep.subr.mxu0 0.0
    %2216 = vmatpush1.msra.mxu0 0.0
    %2217 = vmatprep.subr.mxu0 0.0
    %2218 = vmatpush1.msra.mxu0 0.0
    %2219 = vmatprep.subr.mxu0 0.0
    %2220 = vmatpush1.msra.mxu0 0.0
    %2221 = vmatprep.subr.mxu0 0.0
    %2222 = vmatpush1.msra.mxu0 0.0
    %2223 = vmatprep.subr.mxu0 0.0
    %2224 = vmatpush1.msra.mxu0 0.0
    %2225 = vmatprep.subr.mxu0 0.0
    %2226 = vmatpush1.msra.mxu0 0.0
    %2227 = vmatprep.subr.mxu0 0.0
    %2228 = vmatpush1.msra.mxu0 0.0
    %2229 = vmatprep.subr.mxu0 0.0
    %2230 = vmatpush1.msra.mxu0 0.0
    %2231 = vmatprep.subr.mxu0 0.0
    %2232 = vmatpush1.msra.mxu0 0.0
    %2233 = vmatprep.subr.mxu0 0.0
    %2234 = vmatpush1.msra.mxu0 0.0
    %2235 = vmatprep.subr.mxu0 0.0
    %2236 = vmatpush1.msra.mxu0 0.0
    %2237 = vmatprep.subr.mxu0 0.0
    %2238 = vmatpush1.msra.mxu0 0.0
    %2239 = vmatprep.subr.mxu0 0.0
    %2240 = vmatpush1.msra.mxu0 0.0
    %2241 = vmatprep.subr.mxu0 0.0
    %2242 = vmatpush1.msra.mxu0 0.0
    %2243 = vmatprep.subr.mxu0 0.0
    %2244 = vmatpush1.msra.mxu0 0.0
    %2245 = vmatprep.subr.mxu0 0.0
    %2246 = vmatpush1.msra.mxu0 0.0
    %2247 = vmatprep.subr.mxu0 0.0
    %2248 = vmatpush1.msra.mxu0 0.0
    %2249 = vmatprep.subr.mxu0 0.0
    %2250 = vmatpush1.msra.mxu0 0.0
    %2251 = vmatprep.subr.mxu0 0.0
    %2252 = vmatpush1.msra.mxu0 0.0
    %2253 = vmatprep.subr.mxu0 0.0
    %2254 = vmatpush1.msra.mxu0 0.0
    %2255 = vmatprep.subr.mxu0 0.0
    %2256 = vmatpush1.msra.mxu0 0.0
    %2257 = vmatprep.subr.mxu0 0.0
    %2258 = vmatpush1.msra.mxu0 0.0
    %2259 = vmatprep.mubr.f32.mxu0 0.0
    %2260 = vmatmul.mubr.f32.gmra.mrb[0].mxu0 %v2190
    %v2261 = vpop.f32.mrb[0].mxu0
    %v2262 = vadd.f32 0.0, %v2261
    %v2263 = vpop.f32.mrb[0].mxu0
    %v2264 = vadd.f32 0.0, %v2263
    %2265 = vmatprep.mubr.f32.mxu0 0.0
    %2266 = vmatmul.mubr.f32.gmra.mrb[0].mxu0 %v2193
    %v2267 = vpop.f32.mrb[0].mxu0
    %v2268 = vadd.f32 0.0, %v2267
    %v2269 = vpop.f32.mrb[0].mxu0
    %v2270 = vadd.f32 0.0, %v2269
    %2271 = vdwg.mxu0
    %2272 = vmatprep.subr.mxu0 %v562
    %2273 = vmatpush1.msra.mxu0 %v561
    %2274 = vmatprep.subr.mxu0 0.0
    %2275 = vmatpush1.msra.mxu0 0.0
    %2276 = vmatprep.subr.mxu0 0.0
    %2277 = vmatpush1.msra.mxu0 0.0
    %2278 = vmatprep.subr.mxu0 0.0
    %2279 = vmatpush1.msra.mxu0 0.0
    %2280 = vmatprep.subr.mxu0 0.0
    %2281 = vmatpush1.msra.mxu0 0.0
    %2282 = vmatprep.subr.mxu0 0.0
    %2283 = vmatpush1.msra.mxu0 0.0
    %2284 = vmatprep.subr.mxu0 0.0
    %2285 = vmatpush1.msra.mxu0 0.0
    %2286 = vmatprep.subr.mxu0 0.0
    %2287 = vmatpush1.msra.mxu0 0.0
    %2288 = vmatprep.subr.mxu0 0.0
    %2289 = vmatpush1.msra.mxu0 0.0
    %2290 = vmatprep.subr.mxu0 0.0
    %2291 = vmatpush1.msra.mxu0 0.0
    %2292 = vmatprep.subr.mxu0 0.0
    %2293 = vmatpush1.msra.mxu0 0.0
    %2294 = vmatprep.subr.mxu0 0.0
    %2295 = vmatpush1.msra.mxu0 0.0
    %2296 = vmatprep.subr.mxu0 0.0
    %2297 = vmatpush1.msra.mxu0 0.0
    %2298 = vmatprep.subr.mxu0 0.0
    %2299 = vmatpush1.msra.mxu0 0.0
    %2300 = vmatprep.subr.mxu0 0.0
    %2301 = vmatpush1.msra.mxu0 0.0
    %2302 = vmatprep.subr.mxu0 0.0
    %2303 = vmatpush1.msra.mxu0 0.0
    %2304 = vmatprep.subr.mxu0 0.0
    %2305 = vmatpush1.msra.mxu0 0.0
    %2306 = vmatprep.subr.mxu0 0.0
    %2307 = vmatpush1.msra.mxu0 0.0
    %2308 = vmatprep.subr.mxu0 0.0
    %2309 = vmatpush1.msra.mxu0 0.0
    %2310 = vmatprep.subr.mxu0 0.0
    %2311 = vmatpush1.msra.mxu0 0.0
    %2312 = vmatprep.subr.mxu0 0.0
    %2313 = vmatpush1.msra.mxu0 0.0
    %2314 = vmatprep.subr.mxu0 0.0
    %2315 = vmatpush1.msra.mxu0 0.0
    %2316 = vmatprep.subr.mxu0 0.0
    %2317 = vmatpush1.msra.mxu0 0.0
    %2318 = vmatprep.subr.mxu0 0.0
    %2319 = vmatpush1.msra.mxu0 0.0
    %2320 = vmatprep.subr.mxu0 0.0
    %2321 = vmatpush1.msra.mxu0 0.0
    %2322 = vmatprep.subr.mxu0 0.0
    %2323 = vmatpush1.msra.mxu0 0.0
    %2324 = vmatprep.subr.mxu0 0.0
    %2325 = vmatpush1.msra.mxu0 0.0
    %2326 = vmatprep.subr.mxu0 0.0
    %2327 = vmatpush1.msra.mxu0 0.0
    %2328 = vmatprep.subr.mxu0 0.0
    %2329 = vmatpush1.msra.mxu0 0.0
    %2330 = vmatprep.subr.mxu0 0.0
    %2331 = vmatpush1.msra.mxu0 0.0
    %2332 = vmatprep.subr.mxu0 0.0
    %2333 = vmatpush1.msra.mxu0 0.0
    %2334 = vmatprep.subr.mxu0 0.0
    %2335 = vmatpush1.msra.mxu0 0.0
    %2336 = vmatprep.mubr.f32.mxu0 0.0
    %2337 = vmatmul.mubr.f32.gmra.mrb[0].mxu0 %v2190
    %v2338 = vpop.f32.mrb[0].mxu0
    %v2339 = vadd.f32 0.0, %v2338
    %v2340 = vpop.f32.mrb[0].mxu0
    %v2341 = vadd.f32 0.0, %v2340
    %2342 = vmatprep.mubr.f32.mxu0 0.0
    %2343 = vmatmul.mubr.f32.gmra.mrb[0].mxu0 %v2193
    %v2344 = vpop.f32.mrb[0].mxu0
    %v2345 = vadd.f32 0.0, %v2344
    %v2346 = vpop.f32.mrb[0].mxu0
    %v2347 = vadd.f32 0.0, %v2346
    %2348 = vdwg.mxu0
    %v2349 = vadd.s32 %v85, 128
    %v2350 = vadd.s32 %v85, 256
    %v2351 = vadd.s32 %v85, 384
    %vm2352 = vcmp.ge.s32.totalorder %v85, 381
    %vm2353 = vcmp.ge.s32.totalorder %v2349, 381
    %vm2354 = vcmp.ge.s32.totalorder %v2350, 381
    %vm2355 = vcmp.ge.s32.totalorder %v2351, 381
    %vm2356 = vcmp.lt.s32.totalorder %v85, 389
    %vm2357 = vcmp.lt.s32.totalorder %v2349, 389
    %vm2358 = vcmp.lt.s32.totalorder %v2350, 389
    %vm2359 = vcmp.lt.s32.totalorder %v2351, 389
    %vm2360 = vmand %vm2352, %vm2356
    %vm2361 = vmand %vm2353, %vm2357
    %vm2362 = vmand %vm2354, %vm2358
    %vm2363 = vmand %vm2355, %vm2359
    %vm2364 = vcmp.ge.s32.totalorder %v85, 389
    %vm2365 = vcmp.ge.s32.totalorder %v2349, 389
    %vm2366 = vcmp.ge.s32.totalorder %v2350, 389
    %vm2367 = vcmp.ge.s32.totalorder %v2351, 389
    %vm2368 = vcmp.lt.s32.totalorder %v85, 392
    %vm2369 = vcmp.lt.s32.totalorder %v2349, 392
    %vm2370 = vcmp.lt.s32.totalorder %v2350, 392
    %vm2371 = vcmp.lt.s32.totalorder %v2351, 392
    %vm2372 = vmand %vm2364, %vm2368
    %vm2373 = vmand %vm2365, %vm2369
    %vm2374 = vmand %vm2366, %vm2370
    %vm2375 = vmand %vm2367, %vm2371
    %vm2376 = vcmp.lt.s32.totalorder %v85, 115
    %vm2377 = vcmp.lt.s32.totalorder %v2349, 115
    %vm2378 = vcmp.lt.s32.totalorder %v2350, 115
    %vm2379 = vcmp.lt.s32.totalorder %v2351, 115
    %vm2380 = vmor %vm2376, %vm2360
    %vm2381 = vmor %vm2377, %vm2361
    %vm2382 = vmor %vm2378, %vm2362
    %vm2383 = vmor %vm2379, %vm2363
    %v2384 = vsel %vm2360, 1, 0
    %v2385 = vsel %vm2361, 1, 0
    %v2386 = vsel %vm2362, 1, 0
    %v2387 = vsel %vm2363, 1, 0
    %vm2388 = vcmp.eq.s32.totalorder %v2384, 1
    %vm2389 = vcmp.eq.s32.totalorder %v2385, 1
    %vm2390 = vcmp.eq.s32.totalorder %v2386, 1
    %vm2391 = vcmp.eq.s32.totalorder %v2387, 1
    %v2392 = vsel %vm2388, %v2262, %v1877
    %v2393 = vsel %vm2389, %v2264, %v1878
    %v2394 = vsel %vm2390, %v2339, %v1879
    %v2395 = vsel %vm2391, %v2341, %v1880
    %v2396 = vsel %vm2388, %v2268, %v1881
    %v2397 = vsel %vm2389, %v2270, %v1882
    %v2398 = vsel %vm2390, %v2345, %v1883
    %v2399 = vsel %vm2391, %v2347, %v1884
    %v2400 = vlaneseq
    %v2401 = vshrl.u32 %v2400, 7
    %v2402 = vadd.s32 %v2401, 8
    %s2403 = smul.u32 0, 8
    %s2404 = ssub.s32 %s2403, 8
    %v2405 = vstv %s2404
    %v2406 = vadd.s32 %v2405, %v2402
    %vm2407 = vcmp.eq.s32.totalorder %v2406, 0
    %vm2408 = vcmp.eq.s32.totalorder %v2406, 7
    %v2409 = vrot.slane %v2392, 7
    %v2410 = vrot.slane %v2393, 7
    %v2411 = vrot.slane %v2394, 7
    %v2412 = vrot.slane %v2395, 7
    %v2413 = vrot.slane %v2396, 7
    %v2414 = vrot.slane %v2397, 7
    %v2415 = vrot.slane %v2398, 7
    %v2416 = vrot.slane %v2399, 7
    %vm2417 = vcmp.lt.s32.totalorder %v2401, 1
    %v2418 = vsel %vm2417, %v2409, %v2413
    %v2419 = vsel %vm2417, %v2410, %v2414
    %v2420 = vsel %vm2417, %v2411, %v2415
    %v2421 = vsel %vm2417, %v2412, %v2416
    %v2422 = vrot.slane %v2392, 1
    %v2423 = vrot.slane %v2393, 1
    %v2424 = vrot.slane %v2394, 1
    %v2425 = vrot.slane %v2395, 1
    %v2426 = vrot.slane %v2396, 1
    %v2427 = vrot.slane %v2397, 1
    %v2428 = vrot.slane %v2398, 1
    %v2429 = vrot.slane %v2399, 1
    %vm2430 = vcmp.lt.s32.totalorder %v2401, 7
    %v2431 = vsel %vm2430, %v2426, %v2422
    %v2432 = vsel %vm2430, %v2427, %v2423
    %v2433 = vsel %vm2430, %v2428, %v2424
    %v2434 = vsel %vm2430, %v2429, %v2425
    %v2435 = vsel %vm2372, 1, 0
    %v2436 = vsel %vm2373, 1, 0
    %v2437 = vsel %vm2374, 1, 0
    %v2438 = vsel %vm2375, 1, 0
    %vm2439 = vcmp.eq.s32.totalorder %v2435, 1
    %vm2440 = vcmp.eq.s32.totalorder %v2436, 1
    %vm2441 = vcmp.eq.s32.totalorder %v2437, 1
    %vm2442 = vcmp.eq.s32.totalorder %v2438, 1
    %v2443 = vsel %vm2408, 1, 0
    %vm2444 = vcmp.eq.s32.totalorder %v2443, 1
    %vm2445 = vmand %vm2439, %vm2444
    %vm2446 = vmand %vm2440, %vm2444
    %vm2447 = vmand %vm2441, %vm2444
    %vm2448 = vmand %vm2442, %vm2444
    %v2449 = vsel %vm2445, %v2418, %v2396
    %v2450 = vsel %vm2446, %v2419, %v2397
    %v2451 = vsel %vm2447, %v2420, %v2398
    %v2452 = vsel %vm2448, %v2421, %v2399
    %v2453 = vsub.f32 %v2431, %v2396
    %v2454 = vsub.f32 %v2432, %v2397
    %v2455 = vsub.f32 %v2433, %v2398
    %v2456 = vsub.f32 %v2434, %v2399
    %v2457 = vsub.f32 %v2396, %v2418
    %v2458 = vsub.f32 %v2397, %v2419
    %v2459 = vsub.f32 %v2398, %v2420
    %v2460 = vsub.f32 %v2399, %v2421
    %v2461 = vsel %vm2407, 1, 0
    %vm2462 = vcmp.eq.s32.totalorder %v2461, 1
    %v2463 = vsel %vm2462, %v2453, %v2457
    %v2464 = vsel %vm2462, %v2454, %v2458
    %v2465 = vsel %vm2462, %v2455, %v2459
    %v2466 = vsel %vm2462, %v2456, %v2460
    %v2467 = vsel %vm2380, 1, 0
    %v2468 = vsel %vm2381, 1, 0
    %v2469 = vsel %vm2382, 1, 0
    %v2470 = vsel %vm2383, 1, 0
    %vm2471 = vcmp.eq.s32.totalorder %v2467, 1
    %vm2472 = vcmp.eq.s32.totalorder %v2468, 1
    %vm2473 = vcmp.eq.s32.totalorder %v2469, 1
    %vm2474 = vcmp.eq.s32.totalorder %v2470, 1
    %v2475 = vsel %vm2471, %v2463, %v2449
    %v2476 = vsel %vm2472, %v2464, %v2450
    %v2477 = vsel %vm2473, %v2465, %v2451
    %v2478 = vsel %vm2474, %v2466, %v2452
    %v2479 = vand.u32 2147483647, %v2475
    %v2480 = vand.u32 2147483647, %v2476
    %v2481 = vand.u32 2147483647, %v2477
    %v2482 = vand.u32 2147483647, %v2478
    %vm2483 = vcmp.lt.f32.partialorder %v2479, 0.001
    %vm2484 = vcmp.lt.f32.partialorder %v2480, 0.001
    %vm2485 = vcmp.lt.f32.partialorder %v2481, 0.001
    %vm2486 = vcmp.lt.f32.partialorder %v2482, 0.001
    %v2487 = vsel %vm2483, 0.0, %v2475
    %v2488 = vsel %vm2484, 0.0, %v2476
    %v2489 = vsel %vm2485, 0.0, %v2477
    %v2490 = vsel %vm2486, 0.0, %v2478
    %vm2491 = vcmp.gt.f32.partialorder %v2487, 0.0
    %vm2492 = vcmp.gt.f32.partialorder %v2488, 0.0
    %vm2493 = vcmp.gt.f32.partialorder %v2489, 0.0
    %vm2494 = vcmp.gt.f32.partialorder %v2490, 0.0
    %vm2495 = vcmp.lt.f32.partialorder %v2487, 0.0
    %vm2496 = vcmp.lt.f32.partialorder %v2488, 0.0
    %vm2497 = vcmp.lt.f32.partialorder %v2489, 0.0
    %vm2498 = vcmp.lt.f32.partialorder %v2490, 0.0
    %v2499 = vsel %vm2495, -1.0, 0.0
    %v2500 = vsel %vm2496, -1.0, 0.0
    %v2501 = vsel %vm2497, -1.0, 0.0
    %v2502 = vsel %vm2498, -1.0, 0.0
    %v2503 = vsel %vm2491, 1.0, %v2499
    %v2504 = vsel %vm2492, 1.0, %v2500
    %v2505 = vsel %vm2493, 1.0, %v2501
    %v2506 = vsel %vm2494, 1.0, %v2502
    %2507 = vst [vmem:[#allocation7] sm:$0xff] %v2503
    %2508 = vst [vmem:[#allocation7 + $0x8] sm:$0xff] %v2504
    %2509 = vst [vmem:[#allocation7 + $0x10] sm:$0xff] %v2505
    %2510 = vst [vmem:[#allocation7 + $0x18] sm:$0xff] %v2506
    // Predicated region
    $region38: #{tpu_custom_call.1} parent=1 // pred_check
      _
    $region39: #{tpu_custom_call.1} parent=1 // pred_check_branch
      %2512 = sbr.rel (0) target = $region41
    $region40: #{tpu_custom_call.1} parent=1 // pred_region
      %s2514 = ssub.s32 512, 512
      %2515 = vsyncadd [#allocation4], %s2514
      %s2517 = sshll.u32 [#allocation7], 4
      %s2518 = int_to_ptr.vmem [resolvable:$true] %s2517
      %2520 = dma.vmem_to_hbm [thread:$0]  %s2518, 512, %s7, [#allocation4]
    $region41: #{tpu_custom_call.1} parent=1 // pred_fallthru
      _
    // Predicated region
    $region42: #{tpu_custom_call.1} parent=1 // pred_check
      _
    $region43: #{tpu_custom_call.1} parent=1 // pred_check_branch
      %2522 = sbr.rel (0) target = $region45
    $region44: #{tpu_custom_call.1} parent=1 // pred_region
      %2523 = dma.done [#allocation4], 512
    $region45: #{tpu_custom_call.1} parent=1 // pred_fallthru
      _
    %2524 = vsyncpa [#allocation3], 1
    %2525 = vsyncpa [#allocation6], 1
    %2526 = vsyncpa [#allocation4], 1

</llo_original>
